<compile_context>
chip_gen: v7x
topology: tpu7x:2x2x1
jax: 0.10.0
libtpu: 0.0.40
codegen_flags: <defaults>
</compile_context>

<pallas_src>
import functools

import jax
import jax.numpy as jnp
from jax import lax
from jax.experimental import pallas as pl
from jax.experimental.pallas import tpu as pltpu


def _attn_kernel(q_ref, k_ref, v_ref, o_ref, m_ref, l_ref, acc_ref, *,
                 heads, scale, matmul_dtype, exp_dtype):
    """One (N-tile, batch, J-tile) grid step of broadcast multi-head attention.

    q_ref:   (heads, Nt, d)  head-major broadcast query tile (resident per N-tile)
    k_ref:   (Jt, dim)       lane-dense key tile for the current (batch, J-tile)
    v_ref:   (Jt, dim)       lane-dense value tile
    o_ref:   (Nt, dim)       lane-dense output slab (written only at the last J-tile)
    m_ref:   (heads, Nt, 1)  running row max        (f32 scratch)
    l_ref:   (heads, Nt, 1)  running softmax denom  (f32 scratch)
    acc_ref: (heads, Nt, d)  unnormalized output    (f32 scratch, head-major)
    """
    ji = pl.program_id(2)
    d = q_ref.shape[-1]

    @pl.when(ji == 0)
    def _init():
        m_ref[...] = jnp.full_like(m_ref, -jnp.inf)
        l_ref[...] = jnp.zeros_like(l_ref)
        acc_ref[...] = jnp.zeros_like(acc_ref)

    for h in range(heads):                       # static unroll (heads is small)
        sl = slice(h * d, (h + 1) * d)
        # Head-major query slice is lane-aligned at offset 0.  The scale multiply
        # is O(Nt*d) per head per step (<1% of the softmax work); caching it
        # across batches would be unsafe under megacore sharding of the B axis.
        q_h = q_ref[h] * scale                   # (Nt, d)
        k_h = k_ref[:, sl]                       # (Jt, d) read-only lane slice
        v_h = v_ref[:, sl]                       # (Jt, d)
        if matmul_dtype is not None:
            q_h = q_h.astype(matmul_dtype)
            k_h = k_h.astype(matmul_dtype)
            v_h = v_h.astype(matmul_dtype)

        # s = (q * scale) @ k^T : contract on d, no materialized transpose.
        s = lax.dot_general(q_h, k_h, (((1,), (1,)), ((), ())),
                            preferred_element_type=jnp.float32)   # (Nt, Jt) f32

        m_prev = m_ref[h]                                          # (Nt, 1)
        m_new = jnp.maximum(m_prev, jnp.max(s, axis=-1, keepdims=True))
        alpha = jnp.exp(m_prev - m_new)                            # (Nt, 1) f32

        x = s - m_new
        if exp_dtype is not None:                # bf16 exp on the EUP (v6e/v7x)
            p = jnp.exp(x.astype(exp_dtype))
        else:
            p = jnp.exp(x)                       # (Nt, Jt)

        l_ref[h] = alpha * l_ref[h] + jnp.sum(p.astype(jnp.float32),
                                              axis=-1, keepdims=True)
        pv = jnp.dot(p.astype(v_h.dtype), v_h,
                     preferred_element_type=jnp.float32)           # (Nt, d) f32
        acc_ref[h] = alpha * acc_ref[h] + pv     # lane offset 0 (head-major acc)
        m_ref[h] = m_new

    @pl.when(ji == pl.num_programs(2) - 1)
    def _finalize():
        # Assemble the lane-dense (Nt, dim) output slab once per (N-tile, batch).
        for h in range(heads):
            sl = slice(h * d, (h + 1) * d)
            o_ref[:, sl] = (acc_ref[h] *
                            pl.reciprocal(l_ref[h], approx=True)).astype(o_ref.dtype)


def _lane_pad(n):
    return ((n + 127) // 128) * 128


def _sub_pad(n):
    return ((n + 7) // 8) * 8


def _vmem_bytes_estimate(nt, jt, dim, heads, d, in_itemsize):
    """Rough padded-VMEM footprint of one grid step (double-buffered tiles)."""
    f32 = 4
    q_tiles = 2 * heads * _sub_pad(nt) * _lane_pad(d) * in_itemsize
    kv_tiles = 2 * 2 * _sub_pad(jt) * _lane_pad(dim) * in_itemsize
    out_tiles = 2 * _sub_pad(nt) * _lane_pad(dim) * in_itemsize
    acc = heads * _sub_pad(nt) * _lane_pad(d) * f32
    ml = 2 * heads * _sub_pad(nt) * _lane_pad(1) * f32       # lane-padded m / l
    interm = 3 * _sub_pad(nt) * _lane_pad(jt) * f32          # s / p / exp temps
    return q_tiles + kv_tiles + out_tiles + acc + ml + interm


def _divisors_desc(size, target, multiple):
    lo = max(1, multiple)
    return [t for t in range(min(size, target), lo - 1, -1)
            if size % t == 0 and t % multiple == 0]


def _pick_tiles(N, J, dim, heads, d, in_itemsize, nt_target, jt_target, budget):
    """Largest (Nt, Jt) divisors that fit the VMEM budget.

    Nt is prioritized (it divides K/V HBM re-reads); Jt prefers multiples of 128
    (lane-dense scores, full-depth PV contraction), then multiples of 8.
    # TODO(synk): pad+mask to support awkward (prime) N/J instead of the
    # full-extent fallback.
    """
    jt_cands = (_divisors_desc(J, jt_target, 128)
                or _divisors_desc(J, jt_target, 8) or [J])
    nt_cands = _divisors_desc(N, nt_target, 8) or [N]
    for nt in nt_cands:
        for jt in jt_cands:
            if _vmem_bytes_estimate(nt, jt, dim, heads, d, in_itemsize) <= budget:
                return nt, jt
    return nt_cands[-1], jt_cands[-1]


def _vmem_capacity_bytes(default=64 * 1024 * 1024):
    # 64 MiB fallback is safe on every generation (v7x has 64 MiB per TC).
    try:
        info = pltpu.get_tpu_info()
        return int(getattr(info, "vmem_capacity_bytes", default))
    except Exception:
        return default


def broad_multi_head_attention(Q, K, V, *, dim, heads,
                               nt_target=1024, jt_target=512,
                               matmul_dtype=None, exp_dtype=None,
                               vmem_budget_fraction=0.7):
    """Pallas TPU implementation of BroadMultiHeadAttention.forward.

    Q: (1, N, dim) broadcast query; K, V: (B, J, dim). Returns (B, N, dim).

    matmul_dtype: optional dtype for the QK^T / PV operands (accumulation stays
        f32). jnp.bfloat16 is recommended for f32 inputs on v6e/v7x.
    exp_dtype: optional dtype for the softmax exponent. jnp.bfloat16 roughly
        doubles EUP throughput on v6e/v7x; keep None (f32) on v5e.
    """
    assert dim % heads == 0, "dim must be divisible by heads"
    d = dim // heads
    scale = float(d) ** -0.5

    Q2 = Q[0]                      # (N, dim); avoids squeeze()'s N==1 hazard
    N = Q2.shape[0]
    B, J, _ = K.shape

    # Head-major broadcast query (tiny tensor -> cheap, one-time XLA transpose):
    # gives lane-aligned per-head reads inside the kernel.  K/V stay in their
    # native lane-dense layout so no extra HBM passes over the big operands.
    Qh = jnp.transpose(Q2.reshape(N, heads, d), (1, 0, 2))     # (heads, N, d)

    in_itemsize = jnp.dtype(Q.dtype).itemsize
    vmem_cap = _vmem_capacity_bytes()
    Nt, Jt = _pick_tiles(N, J, dim, heads, d, in_itemsize,
                         nt_target, jt_target,
                         int(vmem_cap * vmem_budget_fraction))
    vmem_usage = _vmem_bytes_estimate(Nt, Jt, dim, heads, d, in_itemsize)
    vmem_limit = int(min(max(2 * vmem_usage, 32 * 2 ** 20), int(0.92 * vmem_cap)))

    grid_n = N // Nt
    grid = (grid_n, B, J // Jt)    # J-tiles innermost (reduction axis)

    kernel = functools.partial(_attn_kernel, heads=heads, scale=scale,
                               matmul_dtype=matmul_dtype, exp_dtype=exp_dtype)

    cost = pl.CostEstimate(
        flops=int(4 * B * N * J * dim),            # QK^T + PV (2 flops / MAC)
        transcendentals=int(B * heads * N * J),    # exp()
        bytes_accessed=int(in_itemsize * (heads * N * d              # Q once
                                          + grid_n * 2 * B * J * dim  # K/V re-reads
                                          + B * N * dim)),            # output
    )

    out = pl.pallas_call(
        kernel,
        out_shape=jax.ShapeDtypeStruct((B, N, dim), Q.dtype),
        grid_spec=pltpu.PrefetchScalarGridSpec(
            num_scalar_prefetch=0,
            grid=grid,
            in_specs=[
                # Broadcast query: block index depends only on the outermost
                # axis, so the tile is DMA'd once per N-tile and stays resident
                # across the whole (B, J) sweep.
                pl.BlockSpec((heads, Nt, d), lambda ni, b, ji: (0, ni, 0)),
                pl.BlockSpec((None, Jt, dim), lambda ni, b, ji: (b, ji, 0)),
                pl.BlockSpec((None, Jt, dim), lambda ni, b, ji: (b, ji, 0)),
            ],
            out_specs=pl.BlockSpec((None, Nt, dim),
                                   lambda ni, b, ji: (b, ni, 0)),
            scratch_shapes=[
                pltpu.VMEM((heads, Nt, 1), jnp.float32),   # running max
                pltpu.VMEM((heads, Nt, 1), jnp.float32),   # running denom
                pltpu.VMEM((heads, Nt, d), jnp.float32),   # head-major acc
            ],
        ),
        compiler_params=pltpu.CompilerParams(
            # NOTE (v7x megacore): the two parallel axes should expose >= 2
            # blocks total (N/Nt >= 2 or B >= 2) to keep both TensorCores busy.
            dimension_semantics=("parallel", "parallel", "arbitrary"),
            vmem_limit_bytes=vmem_limit),
        cost_estimate=cost,
    )(Qh, K, V)
    return out


def _reference(Q, K, V, *, dim, heads):
    d = dim // heads
    scale = float(d) ** -0.5
    Q2 = Q[0]
    N = Q2.shape[0]
    q_h = jnp.transpose(Q2.reshape(N, heads, d), (1, 0, 2))
    B, J, _ = K.shape
    k_h = jnp.transpose(K.reshape(B, J, heads, d), (0, 2, 1, 3))
    v_h = jnp.transpose(V.reshape(B, J, heads, d), (0, 2, 1, 3))
    dots = jnp.einsum('hid,bhjd->bhij', q_h, k_h) * scale
    attn = jax.nn.softmax(dots, axis=-1)
    out = jnp.einsum('bhij,bhjd->bhid', attn, v_h)
    return jnp.transpose(out, (0, 2, 1, 3)).reshape(B, N, dim)


if __name__ == "__main__":
    def _run_case(name, B, N, J, dim, heads, dtype, seed, tol, **kwargs):
        kq, kk, kv = jax.random.split(jax.random.PRNGKey(seed), 3)
        Q = jax.random.normal(kq, (1, N, dim), dtype=jnp.float32).astype(dtype)
        K = jax.random.normal(kk, (B, J, dim), dtype=jnp.float32).astype(dtype)
        V = jax.random.normal(kv, (B, J, dim), dtype=jnp.float32).astype(dtype)
        out = jax.block_until_ready(
            broad_multi_head_attention(Q, K, V, dim=dim, heads=heads, **kwargs))
        ref = _reference(Q.astype(jnp.float32), K.astype(jnp.float32),
                         V.astype(jnp.float32), dim=dim, heads=heads)
        assert out.shape == (B, N, dim), f"{name}: bad shape {out.shape}"
        out32 = out.astype(jnp.float32)
        assert jnp.allclose(out32, ref, atol=tol, rtol=tol), (
            f"{name}: mismatch, max abs err "
            f"{float(jnp.max(jnp.abs(out32 - ref))):.4e}")

    # Case 1: tiny shapes consistent with the module's forward (single tile).
    _run_case("tiny", B=2, N=8, J=16, dim=32, heads=4,
              dtype=jnp.float32, seed=0, tol=1e-2)

    # Case 2: multi-tile N/J exercising the online-softmax accumulator (f32,
    # exact native-dtype matmuls).
    _run_case("multi_tile", B=2, N=128, J=512, dim=64, heads=4,
              dtype=jnp.float32, seed=1, tol=1e-2)

    # Case 3: bf16 operands + bf16 exp — the recommended v6e/v7x configuration.
    _run_case("bf16", B=2, N=128, J=512, dim=64, heads=4,
              dtype=jnp.bfloat16, seed=2, tol=3e-2, exp_dtype=jnp.bfloat16)

    print("KERNEL_OK")
</pallas_src>

<mosaic_0001>
module attributes {stable_mosaic.version = 11 : i64} {
  func.func @_attn_kernel(%arg0: i32, %arg1: i32, %arg2: i32, %arg3: memref<4x8x8xf32, #tpu.memory_space<vmem>>, %arg4: memref<1x16x32xf32, #tpu.memory_space<vmem>>, %arg5: memref<1x16x32xf32, #tpu.memory_space<vmem>>, %arg6: memref<1x8x32xf32, #tpu.memory_space<vmem>>, %arg7: memref<4x8x1xf32, #tpu.memory_space<vmem>>, %arg8: memref<4x8x1xf32, #tpu.memory_space<vmem>>, %arg9: memref<4x8x8xf32, #tpu.memory_space<vmem>>) attributes {dimension_semantics = [#tpu.dimension_semantics<parallel>, #tpu.dimension_semantics<parallel>, #tpu.dimension_semantics<arbitrary>], iteration_bounds = array<i64: 1, 2, 1>, scalar_prefetch = 0 : i64, scratch_operands = 3 : i64, tpu.core_type = #tpu.core_type<tc>, window_params = [{transform_indices = @transform_0, window_bounds = array<i64: 4, 8, 8>}, {transform_indices = @transform_1, window_bounds = array<i64: 1, 16, 32>}, {transform_indices = @transform_2, window_bounds = array<i64: 1, 16, 32>}, {transform_indices = @transform_3, window_bounds = array<i64: 1, 8, 32>}]} {
    %c0_i32 = arith.constant 0 : i32
    %0 = arith.cmpi eq, %arg2, %c0_i32 : i32
    %1 = arith.extui %0 : i1 to i32
    %c0_i32_0 = arith.constant 0 : i32
    %2 = arith.cmpi ne, %1, %c0_i32_0 : i32
    scf.if %2 {
      %cst_123 = arith.constant 0xFF800000 : f32
      %166 = vector.broadcast %cst_123 : f32 to vector<4x8x1xf32>
      %c0_124 = arith.constant 0 : index
      %c0_125 = arith.constant 0 : index
      %c0_126 = arith.constant 0 : index
      %167 = vector.load %arg7[%c0_124, %c0_125, %c0_126] : memref<4x8x1xf32, #tpu.memory_space<vmem>>, vector<4x8x1xf32>
      tpu.vector_store %arg7[%c0_124, %c0_125, %c0_126], %166 {strides = array<i32>} : memref<4x8x1xf32, #tpu.memory_space<vmem>>, vector<4x8x1xf32>,
      %cst_127 = arith.constant 0.000000e+00 : f32
      %168 = vector.broadcast %cst_127 : f32 to vector<4x8x1xf32>
      %c0_128 = arith.constant 0 : index
      %c0_129 = arith.constant 0 : index
      %c0_130 = arith.constant 0 : index
      %169 = vector.load %arg8[%c0_128, %c0_129, %c0_130] : memref<4x8x1xf32, #tpu.memory_space<vmem>>, vector<4x8x1xf32>
      tpu.vector_store %arg8[%c0_128, %c0_129, %c0_130], %168 {strides = array<i32>} : memref<4x8x1xf32, #tpu.memory_space<vmem>>, vector<4x8x1xf32>,
      %cst_131 = arith.constant 0.000000e+00 : f32
      %170 = vector.broadcast %cst_131 : f32 to vector<4x8x8xf32>
      %c0_132 = arith.constant 0 : index
      %c0_133 = arith.constant 0 : index
      %c0_134 = arith.constant 0 : index
      %171 = vector.load %arg9[%c0_132, %c0_133, %c0_134] : memref<4x8x8xf32, #tpu.memory_space<vmem>>, vector<4x8x8xf32>
      tpu.vector_store %arg9[%c0_132, %c0_133, %c0_134], %170 {strides = array<i32>} : memref<4x8x8xf32, #tpu.memory_space<vmem>>, vector<4x8x8xf32>,
    } else {
    }
    %c0 = arith.constant 0 : index
    %c0_1 = arith.constant 0 : index
    %c0_2 = arith.constant 0 : index
    %3 = vector.load %arg3[%c0, %c0_1, %c0_2] : memref<4x8x8xf32, #tpu.memory_space<vmem>>, vector<1x8x8xf32>
    %4 = vector.shape_cast %3 : vector<1x8x8xf32> to vector<8x8xf32>
    %cst = arith.constant 0.353553385 : f32
    %5 = vector.broadcast %cst : f32 to vector<8x8xf32>
    %6 = arith.mulf %4, %5 : vector<8x8xf32>
    %c0_3 = arith.constant 0 : index
    %c0_4 = arith.constant 0 : index
    %c0_5 = arith.constant 0 : index
    %7 = vector.load %arg4[%c0_3, %c0_4, %c0_5] : memref<1x16x32xf32, #tpu.memory_space<vmem>>, vector<1x16x8xf32>
    %8 = vector.shape_cast %7 : vector<1x16x8xf32> to vector<16x8xf32>
    %c0_6 = arith.constant 0 : index
    %c0_7 = arith.constant 0 : index
    %c0_8 = arith.constant 0 : index
    %9 = vector.load %arg5[%c0_6, %c0_7, %c0_8] : memref<1x16x32xf32, #tpu.memory_space<vmem>>, vector<1x16x8xf32>
    %10 = vector.shape_cast %9 : vector<1x16x8xf32> to vector<16x8xf32>
    %cst_9 = arith.constant dense<0.000000e+00> : vector<8x16xf32>
    %11 = tpu.matmul %6, %8, %cst_9 {dimension_numbers = #tpu.dot_dimension_numbers<[1], [1], [0], [0], [0, 0, 1, 0], [], []>} : vector<8x8xf32>, vector<16x8xf32>, vector<8x16xf32> -> vector<8x16xf32>
    %c0_10 = arith.constant 0 : index
    %c0_11 = arith.constant 0 : index
    %c0_12 = arith.constant 0 : index
    %12 = vector.load %arg7[%c0_10, %c0_11, %c0_12] : memref<4x8x1xf32, #tpu.memory_space<vmem>>, vector<1x8x1xf32>
    %13 = vector.shape_cast %12 : vector<1x8x1xf32> to vector<8x1xf32>
    %cst_13 = arith.constant dense<0xFF800000> : vector<8xf32>
    %14 = vector.multi_reduction <maximumf>, %11, %cst_13 [1] : vector<8x16xf32> to vector<8xf32>
    %15 = vector.shape_cast %14 : vector<8xf32> to vector<8x1xf32>
    %16 = arith.maximumf %13, %15 : vector<8x1xf32>
    %17 = arith.subf %13, %16 : vector<8x1xf32>
    %18 = math.exp %17 : vector<8x1xf32>
    %19 = vector.broadcast %16 : vector<8x1xf32> to vector<8x16xf32>
    %20 = arith.subf %11, %19 : vector<8x16xf32>
    %21 = math.exp %20 : vector<8x16xf32>
    %c0_14 = arith.constant 0 : index
    %c0_15 = arith.constant 0 : index
    %c0_16 = arith.constant 0 : index
    %22 = vector.load %arg8[%c0_14, %c0_15, %c0_16] : memref<4x8x1xf32, #tpu.memory_space<vmem>>, vector<1x8x1xf32>
    %23 = vector.shape_cast %22 : vector<1x8x1xf32> to vector<8x1xf32>
    %24 = arith.mulf %18, %23 : vector<8x1xf32>
    %cst_17 = arith.constant dense<0.000000e+00> : vector<8xf32>
    %25 = vector.multi_reduction <add>, %21, %cst_17 [1] : vector<8x16xf32> to vector<8xf32>
    %26 = vector.shape_cast %25 : vector<8xf32> to vector<8x1xf32>
    %27 = arith.addf %24, %26 : vector<8x1xf32>
    %c0_18 = arith.constant 0 : index
    %c0_19 = arith.constant 0 : index
    %c0_20 = arith.constant 0 : index
    %28 = vector.load %arg8[%c0_18, %c0_19, %c0_20] : memref<4x8x1xf32, #tpu.memory_space<vmem>>, vector<1x8x1xf32>
    %29 = vector.shape_cast %28 : vector<1x8x1xf32> to vector<8x1xf32>
    %30 = vector.shape_cast %27 : vector<8x1xf32> to vector<1x8x1xf32>
    tpu.vector_store %arg8[%c0_18, %c0_19, %c0_20], %30 {strides = array<i32>} : memref<4x8x1xf32, #tpu.memory_space<vmem>>, vector<1x8x1xf32>,
    %cst_21 = arith.constant dense<0.000000e+00> : vector<8x8xf32>
    %31 = tpu.matmul %21, %10, %cst_21 {dimension_numbers = #tpu.dot_dimension_numbers<[1], [0], [0], [1], [0, 0, 1, 1], [], []>} : vector<8x16xf32>, vector<16x8xf32>, vector<8x8xf32> -> vector<8x8xf32>
    %c0_22 = arith.constant 0 : index
    %c0_23 = arith.constant 0 : index
    %c0_24 = arith.constant 0 : index
    %32 = vector.load %arg9[%c0_22, %c0_23, %c0_24] : memref<4x8x8xf32, #tpu.memory_space<vmem>>, vector<1x8x8xf32>
    %33 = vector.shape_cast %32 : vector<1x8x8xf32> to vector<8x8xf32>
    %34 = vector.broadcast %18 : vector<8x1xf32> to vector<8x8xf32>
    %35 = arith.mulf %34, %33 : vector<8x8xf32>
    %36 = arith.addf %35, %31 : vector<8x8xf32>
    %c0_25 = arith.constant 0 : index
    %c0_26 = arith.constant 0 : index
    %c0_27 = arith.constant 0 : index
    %37 = vector.load %arg9[%c0_25, %c0_26, %c0_27] : memref<4x8x8xf32, #tpu.memory_space<vmem>>, vector<1x8x8xf32>
    %38 = vector.shape_cast %37 : vector<1x8x8xf32> to vector<8x8xf32>
    %39 = vector.shape_cast %36 : vector<8x8xf32> to vector<1x8x8xf32>
    tpu.vector_store %arg9[%c0_25, %c0_26, %c0_27], %39 {strides = array<i32>} : memref<4x8x8xf32, #tpu.memory_space<vmem>>, vector<1x8x8xf32>,
    %c0_28 = arith.constant 0 : index
    %c0_29 = arith.constant 0 : index
    %c0_30 = arith.constant 0 : index
    %40 = vector.load %arg7[%c0_28, %c0_29, %c0_30] : memref<4x8x1xf32, #tpu.memory_space<vmem>>, vector<1x8x1xf32>
    %41 = vector.shape_cast %40 : vector<1x8x1xf32> to vector<8x1xf32>
    %42 = vector.shape_cast %16 : vector<8x1xf32> to vector<1x8x1xf32>
    tpu.vector_store %arg7[%c0_28, %c0_29, %c0_30], %42 {strides = array<i32>} : memref<4x8x1xf32, #tpu.memory_space<vmem>>, vector<1x8x1xf32>,
    %c1 = arith.constant 1 : index
    %c0_31 = arith.constant 0 : index
    %c0_32 = arith.constant 0 : index
    %43 = vector.load %arg3[%c1, %c0_31, %c0_32] : memref<4x8x8xf32, #tpu.memory_space<vmem>>, vector<1x8x8xf32>
    %44 = vector.shape_cast %43 : vector<1x8x8xf32> to vector<8x8xf32>
    %cst_33 = arith.constant 0.353553385 : f32
    %45 = vector.broadcast %cst_33 : f32 to vector<8x8xf32>
    %46 = arith.mulf %44, %45 : vector<8x8xf32>
    %c0_34 = arith.constant 0 : index
    %c0_35 = arith.constant 0 : index
    %c8 = arith.constant 8 : index
    %47 = vector.load %arg4[%c0_34, %c0_35, %c8] : memref<1x16x32xf32, #tpu.memory_space<vmem>>, vector<1x16x8xf32>
    %48 = vector.shape_cast %47 : vector<1x16x8xf32> to vector<16x8xf32>
    %c0_36 = arith.constant 0 : index
    %c0_37 = arith.constant 0 : index
    %c8_38 = arith.constant 8 : index
    %49 = vector.load %arg5[%c0_36, %c0_37, %c8_38] : memref<1x16x32xf32, #tpu.memory_space<vmem>>, vector<1x16x8xf32>
    %50 = vector.shape_cast %49 : vector<1x16x8xf32> to vector<16x8xf32>
    %cst_39 = arith.constant dense<0.000000e+00> : vector<8x16xf32>
    %51 = tpu.matmul %46, %48, %cst_39 {dimension_numbers = #tpu.dot_dimension_numbers<[1], [1], [0], [0], [0, 0, 1, 0], [], []>} : vector<8x8xf32>, vector<16x8xf32>, vector<8x16xf32> -> vector<8x16xf32>
    %c1_40 = arith.constant 1 : index
    %c0_41 = arith.constant 0 : index
    %c0_42 = arith.constant 0 : index
    %52 = vector.load %arg7[%c1_40, %c0_41, %c0_42] : memref<4x8x1xf32, #tpu.memory_space<vmem>>, vector<1x8x1xf32>
    %53 = vector.shape_cast %52 : vector<1x8x1xf32> to vector<8x1xf32>
    %cst_43 = arith.constant dense<0xFF800000> : vector<8xf32>
    %54 = vector.multi_reduction <maximumf>, %51, %cst_43 [1] : vector<8x16xf32> to vector<8xf32>
    %55 = vector.shape_cast %54 : vector<8xf32> to vector<8x1xf32>
    %56 = arith.maximumf %53, %55 : vector<8x1xf32>
    %57 = arith.subf %53, %56 : vector<8x1xf32>
    %58 = math.exp %57 : vector<8x1xf32>
    %59 = vector.broadcast %56 : vector<8x1xf32> to vector<8x16xf32>
    %60 = arith.subf %51, %59 : vector<8x16xf32>
    %61 = math.exp %60 : vector<8x16xf32>
    %c1_44 = arith.constant 1 : index
    %c0_45 = arith.constant 0 : index
    %c0_46 = arith.constant 0 : index
    %62 = vector.load %arg8[%c1_44, %c0_45, %c0_46] : memref<4x8x1xf32, #tpu.memory_space<vmem>>, vector<1x8x1xf32>
    %63 = vector.shape_cast %62 : vector<1x8x1xf32> to vector<8x1xf32>
    %64 = arith.mulf %58, %63 : vector<8x1xf32>
    %cst_47 = arith.constant dense<0.000000e+00> : vector<8xf32>
    %65 = vector.multi_reduction <add>, %61, %cst_47 [1] : vector<8x16xf32> to vector<8xf32>
    %66 = vector.shape_cast %65 : vector<8xf32> to vector<8x1xf32>
    %67 = arith.addf %64, %66 : vector<8x1xf32>
    %c1_48 = arith.constant 1 : index
    %c0_49 = arith.constant 0 : index
    %c0_50 = arith.constant 0 : index
    %68 = vector.load %arg8[%c1_48, %c0_49, %c0_50] : memref<4x8x1xf32, #tpu.memory_space<vmem>>, vector<1x8x1xf32>
    %69 = vector.shape_cast %68 : vector<1x8x1xf32> to vector<8x1xf32>
    %70 = vector.shape_cast %67 : vector<8x1xf32> to vector<1x8x1xf32>
    tpu.vector_store %arg8[%c1_48, %c0_49, %c0_50], %70 {strides = array<i32>} : memref<4x8x1xf32, #tpu.memory_space<vmem>>, vector<1x8x1xf32>,
    %cst_51 = arith.constant dense<0.000000e+00> : vector<8x8xf32>
    %71 = tpu.matmul %61, %50, %cst_51 {dimension_numbers = #tpu.dot_dimension_numbers<[1], [0], [0], [1], [0, 0, 1, 1], [], []>} : vector<8x16xf32>, vector<16x8xf32>, vector<8x8xf32> -> vector<8x8xf32>
    %c1_52 = arith.constant 1 : index
    %c0_53 = arith.constant 0 : index
    %c0_54 = arith.constant 0 : index
    %72 = vector.load %arg9[%c1_52, %c0_53, %c0_54] : memref<4x8x8xf32, #tpu.memory_space<vmem>>, vector<1x8x8xf32>
    %73 = vector.shape_cast %72 : vector<1x8x8xf32> to vector<8x8xf32>
    %74 = vector.broadcast %58 : vector<8x1xf32> to vector<8x8xf32>
    %75 = arith.mulf %74, %73 : vector<8x8xf32>
    %76 = arith.addf %75, %71 : vector<8x8xf32>
    %c1_55 = arith.constant 1 : index
    %c0_56 = arith.constant 0 : index
    %c0_57 = arith.constant 0 : index
    %77 = vector.load %arg9[%c1_55, %c0_56, %c0_57] : memref<4x8x8xf32, #tpu.memory_space<vmem>>, vector<1x8x8xf32>
    %78 = vector.shape_cast %77 : vector<1x8x8xf32> to vector<8x8xf32>
    %79 = vector.shape_cast %76 : vector<8x8xf32> to vector<1x8x8xf32>
    tpu.vector_store %arg9[%c1_55, %c0_56, %c0_57], %79 {strides = array<i32>} : memref<4x8x8xf32, #tpu.memory_space<vmem>>, vector<1x8x8xf32>,
    %c1_58 = arith.constant 1 : index
    %c0_59 = arith.constant 0 : index
    %c0_60 = arith.constant 0 : index
    %80 = vector.load %arg7[%c1_58, %c0_59, %c0_60] : memref<4x8x1xf32, #tpu.memory_space<vmem>>, vector<1x8x1xf32>
    %81 = vector.shape_cast %80 : vector<1x8x1xf32> to vector<8x1xf32>
    %82 = vector.shape_cast %56 : vector<8x1xf32> to vector<1x8x1xf32>
    tpu.vector_store %arg7[%c1_58, %c0_59, %c0_60], %82 {strides = array<i32>} : memref<4x8x1xf32, #tpu.memory_space<vmem>>, vector<1x8x1xf32>,
    %c2 = arith.constant 2 : index
    %c0_61 = arith.constant 0 : index
    %c0_62 = arith.constant 0 : index
    %83 = vector.load %arg3[%c2, %c0_61, %c0_62] : memref<4x8x8xf32, #tpu.memory_space<vmem>>, vector<1x8x8xf32>
    %84 = vector.shape_cast %83 : vector<1x8x8xf32> to vector<8x8xf32>
    %cst_63 = arith.constant 0.353553385 : f32
    %85 = vector.broadcast %cst_63 : f32 to vector<8x8xf32>
    %86 = arith.mulf %84, %85 : vector<8x8xf32>
    %c0_64 = arith.constant 0 : index
    %c0_65 = arith.constant 0 : index
    %c16 = arith.constant 16 : index
    %87 = vector.load %arg4[%c0_64, %c0_65, %c16] : memref<1x16x32xf32, #tpu.memory_space<vmem>>, vector<1x16x8xf32>
    %88 = vector.shape_cast %87 : vector<1x16x8xf32> to vector<16x8xf32>
    %c0_66 = arith.constant 0 : index
    %c0_67 = arith.constant 0 : index
    %c16_68 = arith.constant 16 : index
    %89 = vector.load %arg5[%c0_66, %c0_67, %c16_68] : memref<1x16x32xf32, #tpu.memory_space<vmem>>, vector<1x16x8xf32>
    %90 = vector.shape_cast %89 : vector<1x16x8xf32> to vector<16x8xf32>
    %cst_69 = arith.constant dense<0.000000e+00> : vector<8x16xf32>
    %91 = tpu.matmul %86, %88, %cst_69 {dimension_numbers = #tpu.dot_dimension_numbers<[1], [1], [0], [0], [0, 0, 1, 0], [], []>} : vector<8x8xf32>, vector<16x8xf32>, vector<8x16xf32> -> vector<8x16xf32>
    %c2_70 = arith.constant 2 : index
    %c0_71 = arith.constant 0 : index
    %c0_72 = arith.constant 0 : index
    %92 = vector.load %arg7[%c2_70, %c0_71, %c0_72] : memref<4x8x1xf32, #tpu.memory_space<vmem>>, vector<1x8x1xf32>
    %93 = vector.shape_cast %92 : vector<1x8x1xf32> to vector<8x1xf32>
    %cst_73 = arith.constant dense<0xFF800000> : vector<8xf32>
    %94 = vector.multi_reduction <maximumf>, %91, %cst_73 [1] : vector<8x16xf32> to vector<8xf32>
    %95 = vector.shape_cast %94 : vector<8xf32> to vector<8x1xf32>
    %96 = arith.maximumf %93, %95 : vector<8x1xf32>
    %97 = arith.subf %93, %96 : vector<8x1xf32>
    %98 = math.exp %97 : vector<8x1xf32>
    %99 = vector.broadcast %96 : vector<8x1xf32> to vector<8x16xf32>
    %100 = arith.subf %91, %99 : vector<8x16xf32>
    %101 = math.exp %100 : vector<8x16xf32>
    %c2_74 = arith.constant 2 : index
    %c0_75 = arith.constant 0 : index
    %c0_76 = arith.constant 0 : index
    %102 = vector.load %arg8[%c2_74, %c0_75, %c0_76] : memref<4x8x1xf32, #tpu.memory_space<vmem>>, vector<1x8x1xf32>
    %103 = vector.shape_cast %102 : vector<1x8x1xf32> to vector<8x1xf32>
    %104 = arith.mulf %98, %103 : vector<8x1xf32>
    %cst_77 = arith.constant dense<0.000000e+00> : vector<8xf32>
    %105 = vector.multi_reduction <add>, %101, %cst_77 [1] : vector<8x16xf32> to vector<8xf32>
    %106 = vector.shape_cast %105 : vector<8xf32> to vector<8x1xf32>
    %107 = arith.addf %104, %106 : vector<8x1xf32>
    %c2_78 = arith.constant 2 : index
    %c0_79 = arith.constant 0 : index
    %c0_80 = arith.constant 0 : index
    %108 = vector.load %arg8[%c2_78, %c0_79, %c0_80] : memref<4x8x1xf32, #tpu.memory_space<vmem>>, vector<1x8x1xf32>
    %109 = vector.shape_cast %108 : vector<1x8x1xf32> to vector<8x1xf32>
    %110 = vector.shape_cast %107 : vector<8x1xf32> to vector<1x8x1xf32>
    tpu.vector_store %arg8[%c2_78, %c0_79, %c0_80], %110 {strides = array<i32>} : memref<4x8x1xf32, #tpu.memory_space<vmem>>, vector<1x8x1xf32>,
    %cst_81 = arith.constant dense<0.000000e+00> : vector<8x8xf32>
    %111 = tpu.matmul %101, %90, %cst_81 {dimension_numbers = #tpu.dot_dimension_numbers<[1], [0], [0], [1], [0, 0, 1, 1], [], []>} : vector<8x16xf32>, vector<16x8xf32>, vector<8x8xf32> -> vector<8x8xf32>
    %c2_82 = arith.constant 2 : index
    %c0_83 = arith.constant 0 : index
    %c0_84 = arith.constant 0 : index
    %112 = vector.load %arg9[%c2_82, %c0_83, %c0_84] : memref<4x8x8xf32, #tpu.memory_space<vmem>>, vector<1x8x8xf32>
    %113 = vector.shape_cast %112 : vector<1x8x8xf32> to vector<8x8xf32>
    %114 = vector.broadcast %98 : vector<8x1xf32> to vector<8x8xf32>
    %115 = arith.mulf %114, %113 : vector<8x8xf32>
    %116 = arith.addf %115, %111 : vector<8x8xf32>
    %c2_85 = arith.constant 2 : index
    %c0_86 = arith.constant 0 : index
    %c0_87 = arith.constant 0 : index
    %117 = vector.load %arg9[%c2_85, %c0_86, %c0_87] : memref<4x8x8xf32, #tpu.memory_space<vmem>>, vector<1x8x8xf32>
    %118 = vector.shape_cast %117 : vector<1x8x8xf32> to vector<8x8xf32>
    %119 = vector.shape_cast %116 : vector<8x8xf32> to vector<1x8x8xf32>
    tpu.vector_store %arg9[%c2_85, %c0_86, %c0_87], %119 {strides = array<i32>} : memref<4x8x8xf32, #tpu.memory_space<vmem>>, vector<1x8x8xf32>,
    %c2_88 = arith.constant 2 : index
    %c0_89 = arith.constant 0 : index
    %c0_90 = arith.constant 0 : index
    %120 = vector.load %arg7[%c2_88, %c0_89, %c0_90] : memref<4x8x1xf32, #tpu.memory_space<vmem>>, vector<1x8x1xf32>
    %121 = vector.shape_cast %120 : vector<1x8x1xf32> to vector<8x1xf32>
    %122 = vector.shape_cast %96 : vector<8x1xf32> to vector<1x8x1xf32>
    tpu.vector_store %arg7[%c2_88, %c0_89, %c0_90], %122 {strides = array<i32>} : memref<4x8x1xf32, #tpu.memory_space<vmem>>, vector<1x8x1xf32>,
    %c3 = arith.constant 3 : index
    %c0_91 = arith.constant 0 : index
    %c0_92 = arith.constant 0 : index
    %123 = vector.load %arg3[%c3, %c0_91, %c0_92] : memref<4x8x8xf32, #tpu.memory_space<vmem>>, vector<1x8x8xf32>
    %124 = vector.shape_cast %123 : vector<1x8x8xf32> to vector<8x8xf32>
    %cst_93 = arith.constant 0.353553385 : f32
    %125 = vector.broadcast %cst_93 : f32 to vector<8x8xf32>
    %126 = arith.mulf %124, %125 : vector<8x8xf32>
    %c0_94 = arith.constant 0 : index
    %c0_95 = arith.constant 0 : index
    %c24 = arith.constant 24 : index
    %127 = vector.load %arg4[%c0_94, %c0_95, %c24] : memref<1x16x32xf32, #tpu.memory_space<vmem>>, vector<1x16x8xf32>
    %128 = vector.shape_cast %127 : vector<1x16x8xf32> to vector<16x8xf32>
    %c0_96 = arith.constant 0 : index
    %c0_97 = arith.constant 0 : index
    %c24_98 = arith.constant 24 : index
    %129 = vector.load %arg5[%c0_96, %c0_97, %c24_98] : memref<1x16x32xf32, #tpu.memory_space<vmem>>, vector<1x16x8xf32>
    %130 = vector.shape_cast %129 : vector<1x16x8xf32> to vector<16x8xf32>
    %cst_99 = arith.constant dense<0.000000e+00> : vector<8x16xf32>
    %131 = tpu.matmul %126, %128, %cst_99 {dimension_numbers = #tpu.dot_dimension_numbers<[1], [1], [0], [0], [0, 0, 1, 0], [], []>} : vector<8x8xf32>, vector<16x8xf32>, vector<8x16xf32> -> vector<8x16xf32>
    %c3_100 = arith.constant 3 : index
    %c0_101 = arith.constant 0 : index
    %c0_102 = arith.constant 0 : index
    %132 = vector.load %arg7[%c3_100, %c0_101, %c0_102] : memref<4x8x1xf32, #tpu.memory_space<vmem>>, vector<1x8x1xf32>
    %133 = vector.shape_cast %132 : vector<1x8x1xf32> to vector<8x1xf32>
    %cst_103 = arith.constant dense<0xFF800000> : vector<8xf32>
    %134 = vector.multi_reduction <maximumf>, %131, %cst_103 [1] : vector<8x16xf32> to vector<8xf32>
    %135 = vector.shape_cast %134 : vector<8xf32> to vector<8x1xf32>
    %136 = arith.maximumf %133, %135 : vector<8x1xf32>
    %137 = arith.subf %133, %136 : vector<8x1xf32>
    %138 = math.exp %137 : vector<8x1xf32>
    %139 = vector.broadcast %136 : vector<8x1xf32> to vector<8x16xf32>
    %140 = arith.subf %131, %139 : vector<8x16xf32>
    %141 = math.exp %140 : vector<8x16xf32>
    %c3_104 = arith.constant 3 : index
    %c0_105 = arith.constant 0 : index
    %c0_106 = arith.constant 0 : index
    %142 = vector.load %arg8[%c3_104, %c0_105, %c0_106] : memref<4x8x1xf32, #tpu.memory_space<vmem>>, vector<1x8x1xf32>
    %143 = vector.shape_cast %142 : vector<1x8x1xf32> to vector<8x1xf32>
    %144 = arith.mulf %138, %143 : vector<8x1xf32>
    %cst_107 = arith.constant dense<0.000000e+00> : vector<8xf32>
    %145 = vector.multi_reduction <add>, %141, %cst_107 [1] : vector<8x16xf32> to vector<8xf32>
    %146 = vector.shape_cast %145 : vector<8xf32> to vector<8x1xf32>
    %147 = arith.addf %144, %146 : vector<8x1xf32>
    %c3_108 = arith.constant 3 : index
    %c0_109 = arith.constant 0 : index
    %c0_110 = arith.constant 0 : index
    %148 = vector.load %arg8[%c3_108, %c0_109, %c0_110] : memref<4x8x1xf32, #tpu.memory_space<vmem>>, vector<1x8x1xf32>
    %149 = vector.shape_cast %148 : vector<1x8x1xf32> to vector<8x1xf32>
    %150 = vector.shape_cast %147 : vector<8x1xf32> to vector<1x8x1xf32>
    tpu.vector_store %arg8[%c3_108, %c0_109, %c0_110], %150 {strides = array<i32>} : memref<4x8x1xf32, #tpu.memory_space<vmem>>, vector<1x8x1xf32>,
    %cst_111 = arith.constant dense<0.000000e+00> : vector<8x8xf32>
    %151 = tpu.matmul %141, %130, %cst_111 {dimension_numbers = #tpu.dot_dimension_numbers<[1], [0], [0], [1], [0, 0, 1, 1], [], []>} : vector<8x16xf32>, vector<16x8xf32>, vector<8x8xf32> -> vector<8x8xf32>
    %c3_112 = arith.constant 3 : index
    %c0_113 = arith.constant 0 : index
    %c0_114 = arith.constant 0 : index
    %152 = vector.load %arg9[%c3_112, %c0_113, %c0_114] : memref<4x8x8xf32, #tpu.memory_space<vmem>>, vector<1x8x8xf32>
    %153 = vector.shape_cast %152 : vector<1x8x8xf32> to vector<8x8xf32>
    %154 = vector.broadcast %138 : vector<8x1xf32> to vector<8x8xf32>
    %155 = arith.mulf %154, %153 : vector<8x8xf32>
    %156 = arith.addf %155, %151 : vector<8x8xf32>
    %c3_115 = arith.constant 3 : index
    %c0_116 = arith.constant 0 : index
    %c0_117 = arith.constant 0 : index
    %157 = vector.load %arg9[%c3_115, %c0_116, %c0_117] : memref<4x8x8xf32, #tpu.memory_space<vmem>>, vector<1x8x8xf32>
    %158 = vector.shape_cast %157 : vector<1x8x8xf32> to vector<8x8xf32>
    %159 = vector.shape_cast %156 : vector<8x8xf32> to vector<1x8x8xf32>
    tpu.vector_store %arg9[%c3_115, %c0_116, %c0_117], %159 {strides = array<i32>} : memref<4x8x8xf32, #tpu.memory_space<vmem>>, vector<1x8x8xf32>,
    %c3_118 = arith.constant 3 : index
    %c0_119 = arith.constant 0 : index
    %c0_120 = arith.constant 0 : index
    %160 = vector.load %arg7[%c3_118, %c0_119, %c0_120] : memref<4x8x1xf32, #tpu.memory_space<vmem>>, vector<1x8x1xf32>
    %161 = vector.shape_cast %160 : vector<1x8x1xf32> to vector<8x1xf32>
    %162 = vector.shape_cast %136 : vector<8x1xf32> to vector<1x8x1xf32>
    tpu.vector_store %arg7[%c3_118, %c0_119, %c0_120], %162 {strides = array<i32>} : memref<4x8x1xf32, #tpu.memory_space<vmem>>, vector<1x8x1xf32>,
    %c0_i32_121 = arith.constant 0 : i32
    %163 = arith.cmpi eq, %arg2, %c0_i32_121 : i32
    %164 = arith.extui %163 : i1 to i32
    %c0_i32_122 = arith.constant 0 : i32
    %165 = arith.cmpi ne, %164, %c0_i32_122 : i32
    scf.if %165 {
      %c0_123 = arith.constant 0 : index
      %c0_124 = arith.constant 0 : index
      %c0_125 = arith.constant 0 : index
      %166 = vector.load %arg9[%c0_123, %c0_124, %c0_125] : memref<4x8x8xf32, #tpu.memory_space<vmem>>, vector<1x8x8xf32>
      %167 = vector.shape_cast %166 : vector<1x8x8xf32> to vector<8x8xf32>
      %c0_126 = arith.constant 0 : index
      %c0_127 = arith.constant 0 : index
      %c0_128 = arith.constant 0 : index
      %168 = vector.load %arg8[%c0_126, %c0_127, %c0_128] : memref<4x8x1xf32, #tpu.memory_space<vmem>>, vector<1x8x1xf32>
      %169 = vector.shape_cast %168 : vector<1x8x1xf32> to vector<8x1xf32>
      %170 = tpu.reciprocal %169 {approx = true} : vector<8x1xf32> -> vector<8x1xf32>
      %171 = vector.broadcast %170 : vector<8x1xf32> to vector<8x8xf32>
      %172 = arith.mulf %167, %171 : vector<8x8xf32>
      %c0_129 = arith.constant 0 : index
      %c0_130 = arith.constant 0 : index
      %c0_131 = arith.constant 0 : index
      %173 = vector.load %arg6[%c0_129, %c0_130, %c0_131] : memref<1x8x32xf32, #tpu.memory_space<vmem>>, vector<1x8x8xf32>
      %174 = vector.shape_cast %173 : vector<1x8x8xf32> to vector<8x8xf32>
      %175 = vector.shape_cast %172 : vector<8x8xf32> to vector<1x8x8xf32>
      tpu.vector_store %arg6[%c0_129, %c0_130, %c0_131], %175 {strides = array<i32>} : memref<1x8x32xf32, #tpu.memory_space<vmem>>, vector<1x8x8xf32>,
      %c1_132 = arith.constant 1 : index
      %c0_133 = arith.constant 0 : index
      %c0_134 = arith.constant 0 : index
      %176 = vector.load %arg9[%c1_132, %c0_133, %c0_134] : memref<4x8x8xf32, #tpu.memory_space<vmem>>, vector<1x8x8xf32>
      %177 = vector.shape_cast %176 : vector<1x8x8xf32> to vector<8x8xf32>
      %c1_135 = arith.constant 1 : index
      %c0_136 = arith.constant 0 : index
      %c0_137 = arith.constant 0 : index
      %178 = vector.load %arg8[%c1_135, %c0_136, %c0_137] : memref<4x8x1xf32, #tpu.memory_space<vmem>>, vector<1x8x1xf32>
      %179 = vector.shape_cast %178 : vector<1x8x1xf32> to vector<8x1xf32>
      %180 = tpu.reciprocal %179 {approx = true} : vector<8x1xf32> -> vector<8x1xf32>
      %181 = vector.broadcast %180 : vector<8x1xf32> to vector<8x8xf32>
      %182 = arith.mulf %177, %181 : vector<8x8xf32>
      %c0_138 = arith.constant 0 : index
      %c0_139 = arith.constant 0 : index
      %c8_140 = arith.constant 8 : index
      %183 = vector.load %arg6[%c0_138, %c0_139, %c8_140] : memref<1x8x32xf32, #tpu.memory_space<vmem>>, vector<1x8x8xf32>
      %184 = vector.shape_cast %183 : vector<1x8x8xf32> to vector<8x8xf32>
      %185 = vector.shape_cast %182 : vector<8x8xf32> to vector<1x8x8xf32>
      tpu.vector_store %arg6[%c0_138, %c0_139, %c8_140], %185 {strides = array<i32>} : memref<1x8x32xf32, #tpu.memory_space<vmem>>, vector<1x8x8xf32>,
      %c2_141 = arith.constant 2 : index
      %c0_142 = arith.constant 0 : index
      %c0_143 = arith.constant 0 : index
      %186 = vector.load %arg9[%c2_141, %c0_142, %c0_143] : memref<4x8x8xf32, #tpu.memory_space<vmem>>, vector<1x8x8xf32>
      %187 = vector.shape_cast %186 : vector<1x8x8xf32> to vector<8x8xf32>
      %c2_144 = arith.constant 2 : index
      %c0_145 = arith.constant 0 : index
      %c0_146 = arith.constant 0 : index
      %188 = vector.load %arg8[%c2_144, %c0_145, %c0_146] : memref<4x8x1xf32, #tpu.memory_space<vmem>>, vector<1x8x1xf32>
      %189 = vector.shape_cast %188 : vector<1x8x1xf32> to vector<8x1xf32>
      %190 = tpu.reciprocal %189 {approx = true} : vector<8x1xf32> -> vector<8x1xf32>
      %191 = vector.broadcast %190 : vector<8x1xf32> to vector<8x8xf32>
      %192 = arith.mulf %187, %191 : vector<8x8xf32>
      %c0_147 = arith.constant 0 : index
      %c0_148 = arith.constant 0 : index
      %c16_149 = arith.constant 16 : index
      %193 = vector.load %arg6[%c0_147, %c0_148, %c16_149] : memref<1x8x32xf32, #tpu.memory_space<vmem>>, vector<1x8x8xf32>
      %194 = vector.shape_cast %193 : vector<1x8x8xf32> to vector<8x8xf32>
      %195 = vector.shape_cast %192 : vector<8x8xf32> to vector<1x8x8xf32>
      tpu.vector_store %arg6[%c0_147, %c0_148, %c16_149], %195 {strides = array<i32>} : memref<1x8x32xf32, #tpu.memory_space<vmem>>, vector<1x8x8xf32>,
      %c3_150 = arith.constant 3 : index
      %c0_151 = arith.constant 0 : index
      %c0_152 = arith.constant 0 : index
      %196 = vector.load %arg9[%c3_150, %c0_151, %c0_152] : memref<4x8x8xf32, #tpu.memory_space<vmem>>, vector<1x8x8xf32>
      %197 = vector.shape_cast %196 : vector<1x8x8xf32> to vector<8x8xf32>
      %c3_153 = arith.constant 3 : index
      %c0_154 = arith.constant 0 : index
      %c0_155 = arith.constant 0 : index
      %198 = vector.load %arg8[%c3_153, %c0_154, %c0_155] : memref<4x8x1xf32, #tpu.memory_space<vmem>>, vector<1x8x1xf32>
      %199 = vector.shape_cast %198 : vector<1x8x1xf32> to vector<8x1xf32>
      %200 = tpu.reciprocal %199 {approx = true} : vector<8x1xf32> -> vector<8x1xf32>
      %201 = vector.broadcast %200 : vector<8x1xf32> to vector<8x8xf32>
      %202 = arith.mulf %197, %201 : vector<8x8xf32>
      %c0_156 = arith.constant 0 : index
      %c0_157 = arith.constant 0 : index
      %c24_158 = arith.constant 24 : index
      %203 = vector.load %arg6[%c0_156, %c0_157, %c24_158] : memref<1x8x32xf32, #tpu.memory_space<vmem>>, vector<1x8x8xf32>
      %204 = vector.shape_cast %203 : vector<1x8x8xf32> to vector<8x8xf32>
      %205 = vector.shape_cast %202 : vector<8x8xf32> to vector<1x8x8xf32>
      tpu.vector_store %arg6[%c0_156, %c0_157, %c24_158], %205 {strides = array<i32>} : memref<1x8x32xf32, #tpu.memory_space<vmem>>, vector<1x8x8xf32>,
    } else {
    }
    return
  }
  func.func @transform_0(%arg0: i32, %arg1: i32, %arg2: i32) -> (i32, i32, i32) {
    %c0_i32 = arith.constant 0 : i32
    %c0_i32_0 = arith.constant 0 : i32
    %c0_i32_1 = arith.constant 0 : i32
    return %c0_i32, %arg0, %c0_i32_0 : i32, i32, i32
  }
  func.func @transform_1(%arg0: i32, %arg1: i32, %arg2: i32) -> (i32, i32, i32) {
    %c0_i32 = arith.constant 0 : i32
    %c0_i32_0 = arith.constant 0 : i32
    return %arg1, %arg2, %c0_i32 : i32, i32, i32
  }
  func.func @transform_2(%arg0: i32, %arg1: i32, %arg2: i32) -> (i32, i32, i32) {
    %c0_i32 = arith.constant 0 : i32
    %c0_i32_0 = arith.constant 0 : i32
    return %arg1, %arg2, %c0_i32 : i32, i32, i32
  }
  func.func @transform_3(%arg0: i32, %arg1: i32, %arg2: i32) -> (i32, i32, i32) {
    %c0_i32 = arith.constant 0 : i32
    %c0_i32_0 = arith.constant 0 : i32
    return %arg1, %arg0, %c0_i32 : i32, i32, i32
  }
}

</mosaic_0001>

<llo_original>
// kernel: tpu_custom_call.1
$region0: #{tpu_custom_call.1}
  #allocation0 [shape = 'u32[]', space=smem, size = 0x4, offset = 0x4, fixed_abs, tag = 'smem constant byte address 0x4 - core index']
  #allocation1 [shape = 'u32[144,128]{1,0:T(1,128)}', space=vmem, size = 0x12000, scoped, tag = 'internal scratch']
  #allocation2 [shape = 'f32[4,8,1]{2,1,0:T(8,128)}', space=vmem, size = 0x4000, scoped, tag = 'scratch operand']
  #allocation3 [shape = 'f32[4,8,1]{2,1,0:T(8,128)}', space=vmem, size = 0x4000, scoped, tag = 'scratch operand']
  #allocation4 [shape = 'f32[4,8,8]{2,1,0:T(8,128)}', space=vmem, size = 0x4000, scoped, tag = 'scratch operand']
  %s0 = inlined_call_operand.hbm [shape: f32[4,8,8], index: 0, kind: input, shape index: {}]
  %s1 = inlined_call_operand.hbm [shape: f32[2,16,32], index: 1, kind: input, shape index: {}]
  %s2 = inlined_call_operand.hbm [shape: f32[2,16,32], index: 2, kind: input, shape index: {}]
  %s3 = inlined_call_operand.hbm [shape: f32[2,8,32], index: 3, kind: output, shape index: {}]
  %s4 = sld [smem:[#allocation0]]
  $region65: #{tpu_custom_call.1} parent=0
    _
  %s6 = ssub.s32 1, %s4
  %s7 = scalar_select 0, %s6, %s4
  $region1: #{tpu_custom_call.1} parent=0
    #allocation5 [shape = 'u8[16384]{0}', space=vmem, size = 0x4000, scoped, tag = 'input window, operand 0, single buffered']
    #allocation6 [shape = 's32[2]{0}', space=sflag, size = 0x8, scoped, tag = 'scoped memory for tpu_custom_call.1']
    #allocation7 [shape = 's32[2]{0}', space=sflag, size = 0x8, scoped, tag = 'scoped memory for tpu_custom_call.1']
    #allocation8 [shape = 'u8[16384]{0}', space=vmem, size = 0x4000, scoped, tag = 'input window, operand 1']
    #allocation9 [shape = 's32[2]{0}', space=sflag, size = 0x8, scoped, tag = 'scoped memory for tpu_custom_call.1']
    #allocation10 [shape = 'u8[16384]{0}', space=vmem, size = 0x4000, scoped, tag = 'input window, operand 2']
    #allocation11 [shape = 'u8[8192]{0}', space=vmem, size = 0x2000, scoped, tag = 'output window, operand 0']
    %8 = vsyncpa [#allocation6], 0
    %9 = vsyncpa [#allocation9], 0
    %s10 = scalar_lea.sflag [#allocation9], 1
    %11 = vsyncpa %s10, 0
    %12 = vsyncpa [#allocation7], 0
    %s13 = scalar_lea.sflag [#allocation7], 1
    %14 = vsyncpa %s13, 0
    loop: start=0, step=1, limit=4
    $region2: #{tpu_custom_call.1} parent=1 // loop_pre_header
      _
    $region3: #{tpu_custom_call.1} parent=1 // loop_header
      %s16 = sphi 0, %s20
      %p17 = scmp.ge.s32.totalorder %s16, 4
      %s23 = sphi 0, %s42
      %s24 = sphi 0, %s38
      %s25 = sphi 0, %s34
      %s26 = sphi 0, %s23
      %s27 = sphi 0, %s24
      %s28 = sphi 0, %s25
      %s29 = sphi 0, %s26
      %s30 = sphi 0, %s27
      %s31 = sphi 0, %s28
      %s45 = sphi 0, %s47
      %s48 = sphi 0, %s45
      %s49 = sphi 0, %s48
      %s65 = sphi 0, %s49
      %s73 = sphi 0, %s75
      %s76 = sphi 0, %s73
      %s77 = sphi 0, %s76
      %s93 = sphi 0, %s77
      %s101 = sphi 0, %s103
      %s104 = sphi 0, %s101
      %s105 = sphi 0, %s104
      %s121 = sphi 0, %s105
      %s129 = sphi 0, %s131
      %s132 = sphi 0, %s129
      %s133 = sphi 0, %s132
      %s149 = sphi 0, %s133
    $region4: #{tpu_custom_call.1} parent=1 // loop_header_branch
      %19 = sbr.rel (%p17) target = $region8
    $region5: #{tpu_custom_call.1} parent=1 // loop_body
      %s21 = ssub.s32 %s16, 1
      %s22 = ssub.s32 %s16, 2
      %s32 = sadd.s32 1, %s25
      %p33 = scmp.ge.s32.totalorder %s32, 1
      %s34 = scalar_select %p33, 0, %s32
      %s35 = sadd.s32 1, %s24
      %s36 = scalar_select %p33, %s35, %s24
      %p37 = scmp.ge.s32.totalorder %s36, 2
      %s38 = scalar_select %p37, 0, %s36
      %s39 = sadd.s32 1, %s23
      %s40 = scalar_select %p37, %s39, %s23
      %p41 = scmp.ge.s32.totalorder %s40, 1
      %s42 = scalar_select %p41, 0, %s40
      %s43 = ssub.s32 %s23, %s42
      %p44 = scmp.eq.s32.totalorder %s43, 0
      %s46 = sadd.s32 %s45, 1
      %s47 = scalar_select %p44, %s45, %s46
      %p50 = pneg %p44
      %p51 = scmp.eq.s32.totalorder %s16, 1
      %p52 = por %p50, %p51
      %p53 = scmp.ne.s32.totalorder %s45, %s48
      %p54 = scmp.eq.s32.totalorder %s16, 0
      %p55 = por %p53, %p54
      %p56 = scmp.ne.s32.totalorder %s45, %s48
      %p57 = scmp.eq.s32.totalorder %s21, 1
      %p58 = por %p56, %p57
      %p59 = scmp.ne.s32.totalorder %s48, %s49
      %p60 = scmp.eq.s32.totalorder %s21, 0
      %p61 = por %p59, %p60
      %p62 = scmp.ne.s32.totalorder %s48, %s49
      %p63 = scmp.eq.s32.totalorder %s22, 1
      %p64 = por %p62, %p63
      %p66 = scmp.ne.s32.totalorder %s49, %s65
      %p67 = scmp.eq.s32.totalorder %s22, 0
      %p68 = por %p66, %p67
      %s69 = ssub.s32 %s24, %s38
      %s70 = ssub.s32 %s25, %s34
      %s71 = sor.u32 %s69, %s70
      %p72 = scmp.eq.s32.totalorder %s71, 0
      %s74 = sadd.s32 %s73, 1
      %s75 = scalar_select %p72, %s73, %s74
      %p78 = pneg %p72
      %p79 = scmp.eq.s32.totalorder %s16, 1
      %p80 = por %p78, %p79
      %p81 = scmp.ne.s32.totalorder %s73, %s76
      %p82 = scmp.eq.s32.totalorder %s16, 0
      %p83 = por %p81, %p82
      %p84 = scmp.ne.s32.totalorder %s73, %s76
      %p85 = scmp.eq.s32.totalorder %s21, 1
      %p86 = por %p84, %p85
      %p87 = scmp.ne.s32.totalorder %s76, %s77
      %p88 = scmp.eq.s32.totalorder %s21, 0
      %p89 = por %p87, %p88
      %p90 = scmp.ne.s32.totalorder %s76, %s77
      %p91 = scmp.eq.s32.totalorder %s22, 1
      %p92 = por %p90, %p91
      %p94 = scmp.ne.s32.totalorder %s77, %s93
      %p95 = scmp.eq.s32.totalorder %s22, 0
      %p96 = por %p94, %p95
      %s97 = ssub.s32 %s24, %s38
      %s98 = ssub.s32 %s25, %s34
      %s99 = sor.u32 %s97, %s98
      %p100 = scmp.eq.s32.totalorder %s99, 0
      %s102 = sadd.s32 %s101, 1
      %s103 = scalar_select %p100, %s101, %s102
      %p106 = pneg %p100
      %p107 = scmp.eq.s32.totalorder %s16, 1
      %p108 = por %p106, %p107
      %p109 = scmp.ne.s32.totalorder %s101, %s104
      %p110 = scmp.eq.s32.totalorder %s16, 0
      %p111 = por %p109, %p110
      %p112 = scmp.ne.s32.totalorder %s101, %s104
      %p113 = scmp.eq.s32.totalorder %s21, 1
      %p114 = por %p112, %p113
      %p115 = scmp.ne.s32.totalorder %s104, %s105
      %p116 = scmp.eq.s32.totalorder %s21, 0
      %p117 = por %p115, %p116
      %p118 = scmp.ne.s32.totalorder %s104, %s105
      %p119 = scmp.eq.s32.totalorder %s22, 1
      %p120 = por %p118, %p119
      %p122 = scmp.ne.s32.totalorder %s105, %s121
      %p123 = scmp.eq.s32.totalorder %s22, 0
      %p124 = por %p122, %p123
      %s125 = ssub.s32 %s24, %s38
      %s126 = ssub.s32 %s23, %s42
      %s127 = sor.u32 %s125, %s126
      %p128 = scmp.eq.s32.totalorder %s127, 0
      %s130 = sadd.s32 %s129, 1
      %s131 = scalar_select %p128, %s129, %s130
      %p134 = pneg %p128
      %p135 = scmp.eq.s32.totalorder %s16, 1
      %p136 = por %p134, %p135
      %p137 = scmp.ne.s32.totalorder %s129, %s132
      %p138 = scmp.eq.s32.totalorder %s16, 0
      %p139 = por %p137, %p138
      %p140 = scmp.ne.s32.totalorder %s129, %s132
      %p141 = scmp.eq.s32.totalorder %s21, 1
      %p142 = por %p140, %p141
      %p143 = scmp.ne.s32.totalorder %s132, %s133
      %p144 = scmp.eq.s32.totalorder %s21, 0
      %p145 = por %p143, %p144
      %p146 = scmp.ne.s32.totalorder %s132, %s133
      %p147 = scmp.eq.s32.totalorder %s22, 1
      %p148 = por %p146, %p147
      %p150 = scmp.ne.s32.totalorder %s133, %s149
      %p151 = scmp.eq.s32.totalorder %s22, 0
      %p152 = por %p150, %p151
      %p153 = scmp.le.s32.totalorder 1, %s16
      %p154 = scmp.lt.s32.totalorder %s16, 3
      %p155 = pnand %p153, %p154
      %p156 = pneg %p155
      // Predicated region
      $region9: #{tpu_custom_call.1} parent=5 // pred_check
        _
      $region10: #{tpu_custom_call.1} parent=5 // pred_check_branch
        %158 = sbr.rel (%p155) target = $region12
      $region11: #{tpu_custom_call.1} parent=5 // pred_region
        %s159 = ssub.s32 %s16, 1
        // Predicated region
        $region13: #{tpu_custom_call.1} parent=11 // pred_check
          %p160 = pneg %p61
        $region14: #{tpu_custom_call.1} parent=11 // pred_check_branch
          %162 = sbr.rel (%p160) target = $region16
        $region15: #{tpu_custom_call.1} parent=11 // pred_region
          %s164 = ssub.s32 512, 512
          %165 = vsyncadd [#allocation6], %s164
          %s166 = smul.addr %s26, 128
          %s167 = scalar_lea.hbm %s0, %s166
          %s168 = sshll.u32 [#allocation5], 4
          %s169 = int_to_ptr.vmem [resolvable:$true] %s168
          %174 = dma.hbm_to_vmem [thread:$0]  %s167, 512, %s169, [#allocation6], 128, 128, 8
        $region16: #{tpu_custom_call.1} parent=11 // pred_fallthru
          _
      $region12: #{tpu_custom_call.1} parent=5 // pred_fallthru
        _
      %p175 = scmp.lt.s32.totalorder %s16, 2
      // Predicated region
      $region17: #{tpu_custom_call.1} parent=5 // pred_check
        %p176 = pneg %p175
      $region18: #{tpu_custom_call.1} parent=5 // pred_check_branch
        %178 = sbr.rel (%p176) target = $region20
      $region19: #{tpu_custom_call.1} parent=5 // pred_region
        // Predicated region
        $region21: #{tpu_custom_call.1} parent=19 // pred_check
          %p179 = pneg %p83
        $region22: #{tpu_custom_call.1} parent=19 // pred_check_branch
          %181 = sbr.rel (%p179) target = $region24
        $region23: #{tpu_custom_call.1} parent=19 // pred_region
          %s182 = sand.u32 %s16, 1
          %s183 = scalar_lea.sflag [#allocation9], %s182
          %s184 = sand.u32 %s73, 1
          %s185 = smul.addr %s184, 16
          %s186 = scalar_lea.vmem [#allocation8], %s185
          %s187 = smul.u32 2, %s25
          %s189 = ssub.s32 256, 256
          %190 = vsyncadd %s183, %s189
          %s191 = smul.addr %s24, 2
          %s192 = sadd.s32 %s187, %s191
          %s193 = smul.addr %s192, 128
          %s194 = scalar_lea.hbm %s1, %s193
          %s195 = sshll.u32 %s186, 4
          %s196 = int_to_ptr.vmem [resolvable:$true] %s195
          %201 = dma.hbm_to_vmem [thread:$0]  %s194, 256, %s196, %s183, 128, 128, 8
        $region24: #{tpu_custom_call.1} parent=19 // pred_fallthru
          _
        // Predicated region
        $region25: #{tpu_custom_call.1} parent=19 // pred_check
          %p202 = pneg %p111
        $region26: #{tpu_custom_call.1} parent=19 // pred_check_branch
          %204 = sbr.rel (%p202) target = $region28
        $region27: #{tpu_custom_call.1} parent=19 // pred_region
          %s205 = sand.u32 %s16, 1
          %s206 = scalar_lea.sflag [#allocation9], %s205
          %s207 = sand.u32 %s101, 1
          %s208 = smul.addr %s207, 16
          %s209 = scalar_lea.vmem [#allocation10], %s208
          %s210 = smul.u32 2, %s25
          %s212 = ssub.s32 256, 256
          %213 = vsyncadd %s206, %s212
          %s214 = smul.addr %s24, 2
          %s215 = sadd.s32 %s210, %s214
          %s216 = smul.addr %s215, 128
          %s217 = scalar_lea.hbm %s2, %s216
          %s218 = sshll.u32 %s209, 4
          %s219 = int_to_ptr.vmem [resolvable:$true] %s218
          %224 = dma.hbm_to_vmem [thread:$0]  %s217, 256, %s219, %s206, 128, 128, 8
        $region28: #{tpu_custom_call.1} parent=19 // pred_fallthru
          _
      $region20: #{tpu_custom_call.1} parent=5 // pred_fallthru
        _
      %p225 = scmp.le.s32.totalorder 1, %s16
      %p226 = scmp.lt.s32.totalorder %s16, 3
      %p227 = pnand %p225, %p226
      %p228 = pneg %p227
      // Predicated region
      $region29: #{tpu_custom_call.1} parent=5 // pred_check
        _
      $region30: #{tpu_custom_call.1} parent=5 // pred_check_branch
        %230 = sbr.rel (%p227) target = $region32
      $region31: #{tpu_custom_call.1} parent=5 // pred_region
        %s231 = ssub.s32 %s16, 1
        // Predicated region
        $region33: #{tpu_custom_call.1} parent=31 // pred_check
          %p232 = pneg %p61
        $region34: #{tpu_custom_call.1} parent=31 // pred_check_branch
          %234 = sbr.rel (%p232) target = $region36
        $region35: #{tpu_custom_call.1} parent=31 // pred_region
          %235 = dma.done [#allocation6], 512
        $region36: #{tpu_custom_call.1} parent=31 // pred_fallthru
          _
        %s236 = sand.u32 %s21, 1
        %s237 = scalar_lea.sflag [#allocation9], %s236
        %s238 = sand.u32 %s76, 1
        %s239 = smul.addr %s238, 16
        %s240 = scalar_lea.vmem [#allocation8], %s239
        // Predicated region
        $region37: #{tpu_custom_call.1} parent=31 // pred_check
          %p241 = pneg %p89
        $region38: #{tpu_custom_call.1} parent=31 // pred_check_branch
          %243 = sbr.rel (%p241) target = $region40
        $region39: #{tpu_custom_call.1} parent=31 // pred_region
          %244 = dma.done %s237, 256
        $region40: #{tpu_custom_call.1} parent=31 // pred_fallthru
          _
        %s245 = sand.u32 %s21, 1
        %s246 = scalar_lea.sflag [#allocation9], %s245
        %s247 = sand.u32 %s104, 1
        %s248 = smul.addr %s247, 16
        %s249 = scalar_lea.vmem [#allocation10], %s248
        // Predicated region
        $region41: #{tpu_custom_call.1} parent=31 // pred_check
          %p250 = pneg %p117
        $region42: #{tpu_custom_call.1} parent=31 // pred_check_branch
          %252 = sbr.rel (%p250) target = $region44
        $region43: #{tpu_custom_call.1} parent=31 // pred_region
          %253 = dma.done %s246, 256
        $region44: #{tpu_custom_call.1} parent=31 // pred_fallthru
          _
        %p254 = pneg %p61
        %p255 = pneg %p58
        %s256 = sand.u32 %s21, 1
        %s257 = scalar_lea.sflag [#allocation9], %s256
        %s258 = sand.u32 %s76, 1
        %s259 = smul.addr %s258, 16
        %s260 = scalar_lea.vmem [#allocation8], %s259
        %p261 = pneg %p89
        %p262 = pneg %p86
        %s263 = sand.u32 %s21, 1
        %s264 = scalar_lea.sflag [#allocation9], %s263
        %s265 = sand.u32 %s104, 1
        %s266 = smul.addr %s265, 16
        %s267 = scalar_lea.vmem [#allocation10], %s266
        %p268 = pneg %p117
        %p269 = pneg %p114
        %p270 = pneg %p145
        %p271 = pneg %p142
        %s272 = sand.u32 %s132, 1
        %s273 = scalar_lea.sflag [#allocation7], %s272
        %s274 = sand.u32 %s132, 1
        %s275 = smul.addr %s274, 8
        %s276 = scalar_lea.vmem [#allocation11], %s275
        %s277 = smul.u32 2, %s28
        %s278 = smul.u32 2, %s28
        %p279 = scmp.eq.s32.totalorder %s28, 0
        // Predicated region
        $region45: #{tpu_custom_call.1} parent=31 // pred_check
          %p280 = pneg %p279
        $region46: #{tpu_custom_call.1} parent=31 // pred_check_branch
          %282 = sbr.rel (%p280) target = $region48
        $region47: #{tpu_custom_call.1} parent=31 // pred_region
          %vm283 = vcmask 7168
          %284 = vst.msk [vmem:[#allocation2] sm:$0xff] %vm283, -inf
          %285 = vst.msk [vmem:[#allocation2 + $0x8] sm:$0xff] %vm283, -inf
          %286 = vst.msk [vmem:[#allocation2 + $0x10] sm:$0xff] %vm283, -inf
          %287 = vst.msk [vmem:[#allocation2 + $0x18] sm:$0xff] %vm283, -inf
          %288 = vst.msk [vmem:[#allocation3] sm:$0xff] %vm283, 0.0
          %289 = vst.msk [vmem:[#allocation3 + $0x8] sm:$0xff] %vm283, 0.0
          %290 = vst.msk [vmem:[#allocation3 + $0x10] sm:$0xff] %vm283, 0.0
          %291 = vst.msk [vmem:[#allocation3 + $0x18] sm:$0xff] %vm283, 0.0
          %vm292 = vcmask 64512
          %293 = vst.msk [vmem:[#allocation4] sm:$0xff] %vm292, 0.0
          %294 = vst.msk [vmem:[#allocation4 + $0x8] sm:$0xff] %vm292, 0.0
          %295 = vst.msk [vmem:[#allocation4 + $0x10] sm:$0xff] %vm292, 0.0
          %296 = vst.msk [vmem:[#allocation4 + $0x18] sm:$0xff] %vm292, 0.0
        $region48: #{tpu_custom_call.1} parent=31 // pred_fallthru
          _
        %v297 = vld [vmem:[#allocation5] sm:$0xff]
        %v298 = vmul.f32 %v297, 0.35355338
        %v299 = vld [vmem:[%s240] sm:$0xff]
        %v300 = vld [vmem:[%s240 + $0x8] sm:$0xff]
        %v301 = vld [vmem:[%s249] sm:$0xff]
        %v302 = vld [vmem:[%s249 + $0x8] sm:$0xff]
        %vm303 = vcmask 64512
        %v305 = vsel %vm303, %v298, 0
        %v308 = vsel %vm303, %v299, 0
        %v311 = vsel %vm303, %v300, 0
        %313 = vmatprep.subr.mxu0 0.0
        %314 = vmatpush1.xpose.msra.mxu0 %v308
        %315 = vmatprep.subr.mxu0 0.0
        %316 = vmatpush1.xpose.msra.mxu0 %v311
        %317 = vmatprep.subr.mxu0 0.0
        %318 = vmatpush1.xpose.msra.mxu0 0.0
        %319 = vmatprep.subr.mxu0 0.0
        %320 = vmatpush1.xpose.msra.mxu0 0.0
        %321 = vmatprep.subr.mxu0 0.0
        %322 = vmatpush1.xpose.msra.mxu0 0.0
        %323 = vmatprep.subr.mxu0 0.0
        %324 = vmatpush1.xpose.msra.mxu0 0.0
        %325 = vmatprep.subr.mxu0 0.0
        %326 = vmatpush1.xpose.msra.mxu0 0.0
        %327 = vmatprep.subr.mxu0 0.0
        %328 = vmatpush1.xpose.msra.mxu0 0.0
        %329 = vmatprep.subr.mxu0 0.0
        %330 = vmatpush1.xpose.msra.mxu0 0.0
        %331 = vmatprep.subr.mxu0 0.0
        %332 = vmatpush1.xpose.msra.mxu0 0.0
        %333 = vmatprep.subr.mxu0 0.0
        %334 = vmatpush1.xpose.msra.mxu0 0.0
        %335 = vmatprep.subr.mxu0 0.0
        %336 = vmatpush1.xpose.msra.mxu0 0.0
        %337 = vmatprep.subr.mxu0 0.0
        %338 = vmatpush1.xpose.msra.mxu0 0.0
        %339 = vmatprep.subr.mxu0 0.0
        %340 = vmatpush1.xpose.msra.mxu0 0.0
        %341 = vmatprep.subr.mxu0 0.0
        %342 = vmatpush1.xpose.msra.mxu0 0.0
        %343 = vmatprep.subr.mxu0 0.0
        %344 = vmatpush1.xpose.msra.mxu0 0.0
        %345 = vmatprep.subr.mxu0 0.0
        %346 = vmatpush1.xpose.msra.mxu0 0.0
        %347 = vmatprep.subr.mxu0 0.0
        %348 = vmatpush1.xpose.msra.mxu0 0.0
        %349 = vmatprep.subr.mxu0 0.0
        %350 = vmatpush1.xpose.msra.mxu0 0.0
        %351 = vmatprep.subr.mxu0 0.0
        %352 = vmatpush1.xpose.msra.mxu0 0.0
        %353 = vmatprep.subr.mxu0 0.0
        %354 = vmatpush1.xpose.msra.mxu0 0.0
        %355 = vmatprep.subr.mxu0 0.0
        %356 = vmatpush1.xpose.msra.mxu0 0.0
        %357 = vmatprep.subr.mxu0 0.0
        %358 = vmatpush1.xpose.msra.mxu0 0.0
        %359 = vmatprep.subr.mxu0 0.0
        %360 = vmatpush1.xpose.msra.mxu0 0.0
        %361 = vmatprep.subr.mxu0 0.0
        %362 = vmatpush1.xpose.msra.mxu0 0.0
        %363 = vmatprep.subr.mxu0 0.0
        %364 = vmatpush1.xpose.msra.mxu0 0.0
        %365 = vmatprep.subr.mxu0 0.0
        %366 = vmatpush1.xpose.msra.mxu0 0.0
        %367 = vmatprep.subr.mxu0 0.0
        %368 = vmatpush1.xpose.msra.mxu0 0.0
        %369 = vmatprep.subr.mxu0 0.0
        %370 = vmatpush1.xpose.msra.mxu0 0.0
        %371 = vmatprep.subr.mxu0 0.0
        %372 = vmatpush1.xpose.msra.mxu0 0.0
        %373 = vmatprep.subr.mxu0 0.0
        %374 = vmatpush1.xpose.msra.mxu0 0.0
        %375 = vmatprep.subr.mxu0 0.0
        %376 = vmatpush1.xpose.msra.mxu0 0.0
        %377 = vmatprep.mubr.f32.mxu0 0.0
        %378 = vmatmul.mubr.f32.gmra.mrb[0].mxu0 %v305
        %v379 = vpop.f32.mrb[0].mxu0
        %v380 = vadd.f32 0.0, %v379
        %v381 = vpop.f32.mrb[0].mxu0
        %382 = vdwg.mxu0
        %v383 = vld [vmem:[#allocation2] sm:$0xff]
        %vm384 = vcmask 130048
        %v385 = vsel %vm384, %v380, -inf
        %386 = vmax.xlane.f32.xlu0 %v385
        %v387 = vpop.xlane.xlu0 %386
        %v388 = vmax.f32 %v383, %v387
        %v389 = vsub.f32 %v383, %v388
        %v390 = vmul.f32 %v389, 1.442695
        %v391 = vpow.pop %v390
        %393 = vset.pattern.permute.xlu0 0
        %394 = vperm.xlu0 %393, %v388
        %v395 = vpop.permute.xlu0 %394
        %v397 = vsub.f32 %v380, %v395
        %v398 = vmul.f32 %v397, 1.442695
        %v399 = vpow.pop %v398
        %v400 = vld [vmem:[#allocation3] sm:$0xff]
        %v401 = vmul.f32 %v391, %v400
        %v402 = vsel %vm384, %v399, 0.0
        %403 = vadd.xlane.f32.xlu0 %v402
        %v404 = vpop.xlane.xlu0 %403
        %v405 = vadd.f32 %v401, %v404
        %vm406 = vcmask 7168
        %407 = vst.msk [vmem:[#allocation3] sm:$0xff] %vm406, %v405
        %v409 = vsel %vm384, %v399, 0
        %411 = vmatprep.subr.mxu0 0.0
        %412 = vmatpush1.msra.mxu0 %v301
        %413 = vmatprep.subr.mxu0 0.0
        %414 = vmatpush1.msra.mxu0 %v302
        %415 = vmatprep.subr.mxu0 0.0
        %416 = vmatpush1.msra.mxu0 0.0
        %417 = vmatprep.subr.mxu0 0.0
        %418 = vmatpush1.msra.mxu0 0.0
        %419 = vmatprep.subr.mxu0 0.0
        %420 = vmatpush1.msra.mxu0 0.0
        %421 = vmatprep.subr.mxu0 0.0
        %422 = vmatpush1.msra.mxu0 0.0
        %423 = vmatprep.subr.mxu0 0.0
        %424 = vmatpush1.msra.mxu0 0.0
        %425 = vmatprep.subr.mxu0 0.0
        %426 = vmatpush1.msra.mxu0 0.0
        %427 = vmatprep.subr.mxu0 0.0
        %428 = vmatpush1.msra.mxu0 0.0
        %429 = vmatprep.subr.mxu0 0.0
        %430 = vmatpush1.msra.mxu0 0.0
        %431 = vmatprep.subr.mxu0 0.0
        %432 = vmatpush1.msra.mxu0 0.0
        %433 = vmatprep.subr.mxu0 0.0
        %434 = vmatpush1.msra.mxu0 0.0
        %435 = vmatprep.subr.mxu0 0.0
        %436 = vmatpush1.msra.mxu0 0.0
        %437 = vmatprep.subr.mxu0 0.0
        %438 = vmatpush1.msra.mxu0 0.0
        %439 = vmatprep.subr.mxu0 0.0
        %440 = vmatpush1.msra.mxu0 0.0
        %441 = vmatprep.subr.mxu0 0.0
        %442 = vmatpush1.msra.mxu0 0.0
        %443 = vmatprep.subr.mxu0 0.0
        %444 = vmatpush1.msra.mxu0 0.0
        %445 = vmatprep.subr.mxu0 0.0
        %446 = vmatpush1.msra.mxu0 0.0
        %447 = vmatprep.subr.mxu0 0.0
        %448 = vmatpush1.msra.mxu0 0.0
        %449 = vmatprep.subr.mxu0 0.0
        %450 = vmatpush1.msra.mxu0 0.0
        %451 = vmatprep.subr.mxu0 0.0
        %452 = vmatpush1.msra.mxu0 0.0
        %453 = vmatprep.subr.mxu0 0.0
        %454 = vmatpush1.msra.mxu0 0.0
        %455 = vmatprep.subr.mxu0 0.0
        %456 = vmatpush1.msra.mxu0 0.0
        %457 = vmatprep.subr.mxu0 0.0
        %458 = vmatpush1.msra.mxu0 0.0
        %459 = vmatprep.subr.mxu0 0.0
        %460 = vmatpush1.msra.mxu0 0.0
        %461 = vmatprep.subr.mxu0 0.0
        %462 = vmatpush1.msra.mxu0 0.0
        %463 = vmatprep.subr.mxu0 0.0
        %464 = vmatpush1.msra.mxu0 0.0
        %465 = vmatprep.subr.mxu0 0.0
        %466 = vmatpush1.msra.mxu0 0.0
        %467 = vmatprep.subr.mxu0 0.0
        %468 = vmatpush1.msra.mxu0 0.0
        %469 = vmatprep.subr.mxu0 0.0
        %470 = vmatpush1.msra.mxu0 0.0
        %471 = vmatprep.subr.mxu0 0.0
        %472 = vmatpush1.msra.mxu0 0.0
        %473 = vmatprep.subr.mxu0 0.0
        %474 = vmatpush1.msra.mxu0 0.0
        %475 = vmatprep.mubr.f32.mxu0 0.0
        %476 = vmatmul.mubr.f32.gmra.mrb[0].mxu0 %v409
        %v477 = vpop.f32.mrb[0].mxu0
        %v478 = vadd.f32 0.0, %v477
        %v479 = vpop.f32.mrb[0].mxu0
        %480 = vdwg.mxu0
        %v481 = vld [vmem:[#allocation4] sm:$0xff]
        %483 = vset.pattern.permute.xlu0 0
        %484 = vperm.xlu0 %483, %v391
        %v485 = vpop.permute.xlu0 %484
        %v487 = vmul.f32 %v485, %v481
        %v488 = vadd.f32 %v487, %v478
        %489 = vst.msk [vmem:[#allocation4] sm:$0xff] %vm303, %v488
        %490 = vst.msk [vmem:[#allocation2] sm:$0xff] %vm406, %v388
        %s491 = scalar_lea.vmem [#allocation5], 8
        %v492 = vld [vmem:[%s491] sm:$0xff]
        %v493 = vmul.f32 %v492, 0.35355338
        %v494 = vld [vmem:[%s240] sm:$0xff]
        %v495 = vld [vmem:[%s240 + $0x8] sm:$0xff]
        %v496 = vld [vmem:[%s249] sm:$0xff]
        %v497 = vld [vmem:[%s249 + $0x8] sm:$0xff]
        %500 = vrot.lane.b32.xlu0 %v494, 120
        %v501 = vpop.permute.xlu0 %500
        %502 = vrot.lane.b32.xlu0 %v495, 120
        %v503 = vpop.permute.xlu0 %502
        %v505 = vsel %vm303, %v493, 0
        %v507 = vsel %vm303, %v501, 0
        %v509 = vsel %vm303, %v503, 0
        %511 = vmatprep.subr.mxu0 0.0
        %512 = vmatpush1.xpose.msra.mxu0 %v507
        %513 = vmatprep.subr.mxu0 0.0
        %514 = vmatpush1.xpose.msra.mxu0 %v509
        %515 = vmatprep.subr.mxu0 0.0
        %516 = vmatpush1.xpose.msra.mxu0 0.0
        %517 = vmatprep.subr.mxu0 0.0
        %518 = vmatpush1.xpose.msra.mxu0 0.0
        %519 = vmatprep.subr.mxu0 0.0
        %520 = vmatpush1.xpose.msra.mxu0 0.0
        %521 = vmatprep.subr.mxu0 0.0
        %522 = vmatpush1.xpose.msra.mxu0 0.0
        %523 = vmatprep.subr.mxu0 0.0
        %524 = vmatpush1.xpose.msra.mxu0 0.0
        %525 = vmatprep.subr.mxu0 0.0
        %526 = vmatpush1.xpose.msra.mxu0 0.0
        %527 = vmatprep.subr.mxu0 0.0
        %528 = vmatpush1.xpose.msra.mxu0 0.0
        %529 = vmatprep.subr.mxu0 0.0
        %530 = vmatpush1.xpose.msra.mxu0 0.0
        %531 = vmatprep.subr.mxu0 0.0
        %532 = vmatpush1.xpose.msra.mxu0 0.0
        %533 = vmatprep.subr.mxu0 0.0
        %534 = vmatpush1.xpose.msra.mxu0 0.0
        %535 = vmatprep.subr.mxu0 0.0
        %536 = vmatpush1.xpose.msra.mxu0 0.0
        %537 = vmatprep.subr.mxu0 0.0
        %538 = vmatpush1.xpose.msra.mxu0 0.0
        %539 = vmatprep.subr.mxu0 0.0
        %540 = vmatpush1.xpose.msra.mxu0 0.0
        %541 = vmatprep.subr.mxu0 0.0
        %542 = vmatpush1.xpose.msra.mxu0 0.0
        %543 = vmatprep.subr.mxu0 0.0
        %544 = vmatpush1.xpose.msra.mxu0 0.0
        %545 = vmatprep.subr.mxu0 0.0
        %546 = vmatpush1.xpose.msra.mxu0 0.0
        %547 = vmatprep.subr.mxu0 0.0
        %548 = vmatpush1.xpose.msra.mxu0 0.0
        %549 = vmatprep.subr.mxu0 0.0
        %550 = vmatpush1.xpose.msra.mxu0 0.0
        %551 = vmatprep.subr.mxu0 0.0
        %552 = vmatpush1.xpose.msra.mxu0 0.0
        %553 = vmatprep.subr.mxu0 0.0
        %554 = vmatpush1.xpose.msra.mxu0 0.0
        %555 = vmatprep.subr.mxu0 0.0
        %556 = vmatpush1.xpose.msra.mxu0 0.0
        %557 = vmatprep.subr.mxu0 0.0
        %558 = vmatpush1.xpose.msra.mxu0 0.0
        %559 = vmatprep.subr.mxu0 0.0
        %560 = vmatpush1.xpose.msra.mxu0 0.0
        %561 = vmatprep.subr.mxu0 0.0
        %562 = vmatpush1.xpose.msra.mxu0 0.0
        %563 = vmatprep.subr.mxu0 0.0
        %564 = vmatpush1.xpose.msra.mxu0 0.0
        %565 = vmatprep.subr.mxu0 0.0
        %566 = vmatpush1.xpose.msra.mxu0 0.0
        %567 = vmatprep.subr.mxu0 0.0
        %568 = vmatpush1.xpose.msra.mxu0 0.0
        %569 = vmatprep.subr.mxu0 0.0
        %570 = vmatpush1.xpose.msra.mxu0 0.0
        %571 = vmatprep.subr.mxu0 0.0
        %572 = vmatpush1.xpose.msra.mxu0 0.0
        %573 = vmatprep.subr.mxu0 0.0
        %574 = vmatpush1.xpose.msra.mxu0 0.0
        %575 = vmatprep.mubr.f32.mxu0 0.0
        %576 = vmatmul.mubr.f32.gmra.mrb[0].mxu0 %v505
        %v577 = vpop.f32.mrb[0].mxu0
        %v578 = vadd.f32 0.0, %v577
        %v579 = vpop.f32.mrb[0].mxu0
        %580 = vdwg.mxu0
        %s581 = scalar_lea.vmem [#allocation2], 8
        %v582 = vld [vmem:[%s581] sm:$0xff]
        %v583 = vsel %vm384, %v578, -inf
        %584 = vmax.xlane.f32.xlu0 %v583
        %v585 = vpop.xlane.xlu0 %584
        %v586 = vmax.f32 %v582, %v585
        %v587 = vsub.f32 %v582, %v586
        %v588 = vmul.f32 %v587, 1.442695
        %v589 = vpow.pop %v588
        %591 = vset.pattern.permute.xlu0 0
        %592 = vperm.xlu0 %591, %v586
        %v593 = vpop.permute.xlu0 %592
        %v595 = vsub.f32 %v578, %v593
        %v596 = vmul.f32 %v595, 1.442695
        %v597 = vpow.pop %v596
        %s598 = scalar_lea.vmem [#allocation3], 8
        %v599 = vld [vmem:[%s598] sm:$0xff]
        %v600 = vmul.f32 %v589, %v599
        %v601 = vsel %vm384, %v597, 0.0
        %602 = vadd.xlane.f32.xlu0 %v601
        %v603 = vpop.xlane.xlu0 %602
        %v604 = vadd.f32 %v600, %v603
        %605 = vst.msk [vmem:[%s598] sm:$0xff] %vm406, %v604
        %608 = vrot.lane.b32.xlu0 %v496, 120
        %v609 = vpop.permute.xlu0 %608
        %610 = vrot.lane.b32.xlu0 %v497, 120
        %v611 = vpop.permute.xlu0 %610
        %v615 = vsel %vm384, %v597, 0
        %617 = vmatprep.subr.mxu0 0.0
        %618 = vmatpush1.msra.mxu0 %v609
        %619 = vmatprep.subr.mxu0 0.0
        %620 = vmatpush1.msra.mxu0 %v611
        %621 = vmatprep.subr.mxu0 0.0
        %622 = vmatpush1.msra.mxu0 0.0
        %623 = vmatprep.subr.mxu0 0.0
        %624 = vmatpush1.msra.mxu0 0.0
        %625 = vmatprep.subr.mxu0 0.0
        %626 = vmatpush1.msra.mxu0 0.0
        %627 = vmatprep.subr.mxu0 0.0
        %628 = vmatpush1.msra.mxu0 0.0
        %629 = vmatprep.subr.mxu0 0.0
        %630 = vmatpush1.msra.mxu0 0.0
        %631 = vmatprep.subr.mxu0 0.0
        %632 = vmatpush1.msra.mxu0 0.0
        %633 = vmatprep.subr.mxu0 0.0
        %634 = vmatpush1.msra.mxu0 0.0
        %635 = vmatprep.subr.mxu0 0.0
        %636 = vmatpush1.msra.mxu0 0.0
        %637 = vmatprep.subr.mxu0 0.0
        %638 = vmatpush1.msra.mxu0 0.0
        %639 = vmatprep.subr.mxu0 0.0
        %640 = vmatpush1.msra.mxu0 0.0
        %641 = vmatprep.subr.mxu0 0.0
        %642 = vmatpush1.msra.mxu0 0.0
        %643 = vmatprep.subr.mxu0 0.0
        %644 = vmatpush1.msra.mxu0 0.0
        %645 = vmatprep.subr.mxu0 0.0
        %646 = vmatpush1.msra.mxu0 0.0
        %647 = vmatprep.subr.mxu0 0.0
        %648 = vmatpush1.msra.mxu0 0.0
        %649 = vmatprep.subr.mxu0 0.0
        %650 = vmatpush1.msra.mxu0 0.0
        %651 = vmatprep.subr.mxu0 0.0
        %652 = vmatpush1.msra.mxu0 0.0
        %653 = vmatprep.subr.mxu0 0.0
        %654 = vmatpush1.msra.mxu0 0.0
        %655 = vmatprep.subr.mxu0 0.0
        %656 = vmatpush1.msra.mxu0 0.0
        %657 = vmatprep.subr.mxu0 0.0
        %658 = vmatpush1.msra.mxu0 0.0
        %659 = vmatprep.subr.mxu0 0.0
        %660 = vmatpush1.msra.mxu0 0.0
        %661 = vmatprep.subr.mxu0 0.0
        %662 = vmatpush1.msra.mxu0 0.0
        %663 = vmatprep.subr.mxu0 0.0
        %664 = vmatpush1.msra.mxu0 0.0
        %665 = vmatprep.subr.mxu0 0.0
        %666 = vmatpush1.msra.mxu0 0.0
        %667 = vmatprep.subr.mxu0 0.0
        %668 = vmatpush1.msra.mxu0 0.0
        %669 = vmatprep.subr.mxu0 0.0
        %670 = vmatpush1.msra.mxu0 0.0
        %671 = vmatprep.subr.mxu0 0.0
        %672 = vmatpush1.msra.mxu0 0.0
        %673 = vmatprep.subr.mxu0 0.0
        %674 = vmatpush1.msra.mxu0 0.0
        %675 = vmatprep.subr.mxu0 0.0
        %676 = vmatpush1.msra.mxu0 0.0
        %677 = vmatprep.subr.mxu0 0.0
        %678 = vmatpush1.msra.mxu0 0.0
        %679 = vmatprep.subr.mxu0 0.0
        %680 = vmatpush1.msra.mxu0 0.0
        %681 = vmatprep.mubr.f32.mxu0 0.0
        %682 = vmatmul.mubr.f32.gmra.mrb[0].mxu0 %v615
        %v683 = vpop.f32.mrb[0].mxu0
        %v684 = vadd.f32 0.0, %v683
        %v685 = vpop.f32.mrb[0].mxu0
        %686 = vdwg.mxu0
        %s687 = scalar_lea.vmem [#allocation4], 8
        %v688 = vld [vmem:[%s687] sm:$0xff]
        %690 = vset.pattern.permute.xlu0 0
        %691 = vperm.xlu0 %690, %v589
        %v692 = vpop.permute.xlu0 %691
        %v694 = vmul.f32 %v692, %v688
        %v695 = vadd.f32 %v694, %v684
        %696 = vst.msk [vmem:[%s687] sm:$0xff] %vm303, %v695
        %697 = vst.msk [vmem:[%s581] sm:$0xff] %vm406, %v586
        %s698 = scalar_lea.vmem [#allocation5], 16
        %v699 = vld [vmem:[%s698] sm:$0xff]
        %v700 = vmul.f32 %v699, 0.35355338
        %v701 = vld [vmem:[%s240] sm:$0xff]
        %v702 = vld [vmem:[%s240 + $0x8] sm:$0xff]
        %v703 = vld [vmem:[%s249] sm:$0xff]
        %v704 = vld [vmem:[%s249 + $0x8] sm:$0xff]
        %707 = vrot.lane.b32.xlu0 %v701, 112
        %v708 = vpop.permute.xlu0 %707
        %709 = vrot.lane.b32.xlu0 %v702, 112
        %v710 = vpop.permute.xlu0 %709
        %v712 = vsel %vm303, %v700, 0
        %v714 = vsel %vm303, %v708, 0
        %v716 = vsel %vm303, %v710, 0
        %718 = vmatprep.subr.mxu0 0.0
        %719 = vmatpush1.xpose.msra.mxu0 %v714
        %720 = vmatprep.subr.mxu0 0.0
        %721 = vmatpush1.xpose.msra.mxu0 %v716
        %722 = vmatprep.subr.mxu0 0.0
        %723 = vmatpush1.xpose.msra.mxu0 0.0
        %724 = vmatprep.subr.mxu0 0.0
        %725 = vmatpush1.xpose.msra.mxu0 0.0
        %726 = vmatprep.subr.mxu0 0.0
        %727 = vmatpush1.xpose.msra.mxu0 0.0
        %728 = vmatprep.subr.mxu0 0.0
        %729 = vmatpush1.xpose.msra.mxu0 0.0
        %730 = vmatprep.subr.mxu0 0.0
        %731 = vmatpush1.xpose.msra.mxu0 0.0
        %732 = vmatprep.subr.mxu0 0.0
        %733 = vmatpush1.xpose.msra.mxu0 0.0
        %734 = vmatprep.subr.mxu0 0.0
        %735 = vmatpush1.xpose.msra.mxu0 0.0
        %736 = vmatprep.subr.mxu0 0.0
        %737 = vmatpush1.xpose.msra.mxu0 0.0
        %738 = vmatprep.subr.mxu0 0.0
        %739 = vmatpush1.xpose.msra.mxu0 0.0
        %740 = vmatprep.subr.mxu0 0.0
        %741 = vmatpush1.xpose.msra.mxu0 0.0
        %742 = vmatprep.subr.mxu0 0.0
        %743 = vmatpush1.xpose.msra.mxu0 0.0
        %744 = vmatprep.subr.mxu0 0.0
        %745 = vmatpush1.xpose.msra.mxu0 0.0
        %746 = vmatprep.subr.mxu0 0.0
        %747 = vmatpush1.xpose.msra.mxu0 0.0
        %748 = vmatprep.subr.mxu0 0.0
        %749 = vmatpush1.xpose.msra.mxu0 0.0
        %750 = vmatprep.subr.mxu0 0.0
        %751 = vmatpush1.xpose.msra.mxu0 0.0
        %752 = vmatprep.subr.mxu0 0.0
        %753 = vmatpush1.xpose.msra.mxu0 0.0
        %754 = vmatprep.subr.mxu0 0.0
        %755 = vmatpush1.xpose.msra.mxu0 0.0
        %756 = vmatprep.subr.mxu0 0.0
        %757 = vmatpush1.xpose.msra.mxu0 0.0
        %758 = vmatprep.subr.mxu0 0.0
        %759 = vmatpush1.xpose.msra.mxu0 0.0
        %760 = vmatprep.subr.mxu0 0.0
        %761 = vmatpush1.xpose.msra.mxu0 0.0
        %762 = vmatprep.subr.mxu0 0.0
        %763 = vmatpush1.xpose.msra.mxu0 0.0
        %764 = vmatprep.subr.mxu0 0.0
        %765 = vmatpush1.xpose.msra.mxu0 0.0
        %766 = vmatprep.subr.mxu0 0.0
        %767 = vmatpush1.xpose.msra.mxu0 0.0
        %768 = vmatprep.subr.mxu0 0.0
        %769 = vmatpush1.xpose.msra.mxu0 0.0
        %770 = vmatprep.subr.mxu0 0.0
        %771 = vmatpush1.xpose.msra.mxu0 0.0
        %772 = vmatprep.subr.mxu0 0.0
        %773 = vmatpush1.xpose.msra.mxu0 0.0
        %774 = vmatprep.subr.mxu0 0.0
        %775 = vmatpush1.xpose.msra.mxu0 0.0
        %776 = vmatprep.subr.mxu0 0.0
        %777 = vmatpush1.xpose.msra.mxu0 0.0
        %778 = vmatprep.subr.mxu0 0.0
        %779 = vmatpush1.xpose.msra.mxu0 0.0
        %780 = vmatprep.subr.mxu0 0.0
        %781 = vmatpush1.xpose.msra.mxu0 0.0
        %782 = vmatprep.mubr.f32.mxu0 0.0
        %783 = vmatmul.mubr.f32.gmra.mrb[0].mxu0 %v712
        %v784 = vpop.f32.mrb[0].mxu0
        %v785 = vadd.f32 0.0, %v784
        %v786 = vpop.f32.mrb[0].mxu0
        %787 = vdwg.mxu0
        %s788 = scalar_lea.vmem [#allocation2], 16
        %v789 = vld [vmem:[%s788] sm:$0xff]
        %v790 = vsel %vm384, %v785, -inf
        %791 = vmax.xlane.f32.xlu0 %v790
        %v792 = vpop.xlane.xlu0 %791
        %v793 = vmax.f32 %v789, %v792
        %v794 = vsub.f32 %v789, %v793
        %v795 = vmul.f32 %v794, 1.442695
        %v796 = vpow.pop %v795
        %798 = vset.pattern.permute.xlu0 0
        %799 = vperm.xlu0 %798, %v793
        %v800 = vpop.permute.xlu0 %799
        %v802 = vsub.f32 %v785, %v800
        %v803 = vmul.f32 %v802, 1.442695
        %v804 = vpow.pop %v803
        %s805 = scalar_lea.vmem [#allocation3], 16
        %v806 = vld [vmem:[%s805] sm:$0xff]
        %v807 = vmul.f32 %v796, %v806
        %v808 = vsel %vm384, %v804, 0.0
        %809 = vadd.xlane.f32.xlu0 %v808
        %v810 = vpop.xlane.xlu0 %809
        %v811 = vadd.f32 %v807, %v810
        %812 = vst.msk [vmem:[%s805] sm:$0xff] %vm406, %v811
        %815 = vrot.lane.b32.xlu0 %v703, 112
        %v816 = vpop.permute.xlu0 %815
        %817 = vrot.lane.b32.xlu0 %v704, 112
        %v818 = vpop.permute.xlu0 %817
        %v822 = vsel %vm384, %v804, 0
        %824 = vmatprep.subr.mxu0 0.0
        %825 = vmatpush1.msra.mxu0 %v816
        %826 = vmatprep.subr.mxu0 0.0
        %827 = vmatpush1.msra.mxu0 %v818
        %828 = vmatprep.subr.mxu0 0.0
        %829 = vmatpush1.msra.mxu0 0.0
        %830 = vmatprep.subr.mxu0 0.0
        %831 = vmatpush1.msra.mxu0 0.0
        %832 = vmatprep.subr.mxu0 0.0
        %833 = vmatpush1.msra.mxu0 0.0
        %834 = vmatprep.subr.mxu0 0.0
        %835 = vmatpush1.msra.mxu0 0.0
        %836 = vmatprep.subr.mxu0 0.0
        %837 = vmatpush1.msra.mxu0 0.0
        %838 = vmatprep.subr.mxu0 0.0
        %839 = vmatpush1.msra.mxu0 0.0
        %840 = vmatprep.subr.mxu0 0.0
        %841 = vmatpush1.msra.mxu0 0.0
        %842 = vmatprep.subr.mxu0 0.0
        %843 = vmatpush1.msra.mxu0 0.0
        %844 = vmatprep.subr.mxu0 0.0
        %845 = vmatpush1.msra.mxu0 0.0
        %846 = vmatprep.subr.mxu0 0.0
        %847 = vmatpush1.msra.mxu0 0.0
        %848 = vmatprep.subr.mxu0 0.0
        %849 = vmatpush1.msra.mxu0 0.0
        %850 = vmatprep.subr.mxu0 0.0
        %851 = vmatpush1.msra.mxu0 0.0
        %852 = vmatprep.subr.mxu0 0.0
        %853 = vmatpush1.msra.mxu0 0.0
        %854 = vmatprep.subr.mxu0 0.0
        %855 = vmatpush1.msra.mxu0 0.0
        %856 = vmatprep.subr.mxu0 0.0
        %857 = vmatpush1.msra.mxu0 0.0
        %858 = vmatprep.subr.mxu0 0.0
        %859 = vmatpush1.msra.mxu0 0.0
        %860 = vmatprep.subr.mxu0 0.0
        %861 = vmatpush1.msra.mxu0 0.0
        %862 = vmatprep.subr.mxu0 0.0
        %863 = vmatpush1.msra.mxu0 0.0
        %864 = vmatprep.subr.mxu0 0.0
        %865 = vmatpush1.msra.mxu0 0.0
        %866 = vmatprep.subr.mxu0 0.0
        %867 = vmatpush1.msra.mxu0 0.0
        %868 = vmatprep.subr.mxu0 0.0
        %869 = vmatpush1.msra.mxu0 0.0
        %870 = vmatprep.subr.mxu0 0.0
        %871 = vmatpush1.msra.mxu0 0.0
        %872 = vmatprep.subr.mxu0 0.0
        %873 = vmatpush1.msra.mxu0 0.0
        %874 = vmatprep.subr.mxu0 0.0
        %875 = vmatpush1.msra.mxu0 0.0
        %876 = vmatprep.subr.mxu0 0.0
        %877 = vmatpush1.msra.mxu0 0.0
        %878 = vmatprep.subr.mxu0 0.0
        %879 = vmatpush1.msra.mxu0 0.0
        %880 = vmatprep.subr.mxu0 0.0
        %881 = vmatpush1.msra.mxu0 0.0
        %882 = vmatprep.subr.mxu0 0.0
        %883 = vmatpush1.msra.mxu0 0.0
        %884 = vmatprep.subr.mxu0 0.0
        %885 = vmatpush1.msra.mxu0 0.0
        %886 = vmatprep.subr.mxu0 0.0
        %887 = vmatpush1.msra.mxu0 0.0
        %888 = vmatprep.mubr.f32.mxu0 0.0
        %889 = vmatmul.mubr.f32.gmra.mrb[0].mxu0 %v822
        %v890 = vpop.f32.mrb[0].mxu0
        %v891 = vadd.f32 0.0, %v890
        %v892 = vpop.f32.mrb[0].mxu0
        %893 = vdwg.mxu0
        %s894 = scalar_lea.vmem [#allocation4], 16
        %v895 = vld [vmem:[%s894] sm:$0xff]
        %897 = vset.pattern.permute.xlu0 0
        %898 = vperm.xlu0 %897, %v796
        %v899 = vpop.permute.xlu0 %898
        %v901 = vmul.f32 %v899, %v895
        %v902 = vadd.f32 %v901, %v891
        %903 = vst.msk [vmem:[%s894] sm:$0xff] %vm303, %v902
        %904 = vst.msk [vmem:[%s788] sm:$0xff] %vm406, %v793
        %s905 = scalar_lea.vmem [#allocation5], 24
        %v906 = vld [vmem:[%s905] sm:$0xff]
        %v907 = vmul.f32 %v906, 0.35355338
        %v908 = vld [vmem:[%s240] sm:$0xff]
        %v909 = vld [vmem:[%s240 + $0x8] sm:$0xff]
        %v910 = vld [vmem:[%s249] sm:$0xff]
        %v911 = vld [vmem:[%s249 + $0x8] sm:$0xff]
        %914 = vrot.lane.b32.xlu0 %v908, 104
        %v915 = vpop.permute.xlu0 %914
        %916 = vrot.lane.b32.xlu0 %v909, 104
        %v917 = vpop.permute.xlu0 %916
        %v919 = vsel %vm303, %v907, 0
        %v921 = vsel %vm303, %v915, 0
        %v923 = vsel %vm303, %v917, 0
        %925 = vmatprep.subr.mxu0 0.0
        %926 = vmatpush1.xpose.msra.mxu0 %v921
        %927 = vmatprep.subr.mxu0 0.0
        %928 = vmatpush1.xpose.msra.mxu0 %v923
        %929 = vmatprep.subr.mxu0 0.0
        %930 = vmatpush1.xpose.msra.mxu0 0.0
        %931 = vmatprep.subr.mxu0 0.0
        %932 = vmatpush1.xpose.msra.mxu0 0.0
        %933 = vmatprep.subr.mxu0 0.0
        %934 = vmatpush1.xpose.msra.mxu0 0.0
        %935 = vmatprep.subr.mxu0 0.0
        %936 = vmatpush1.xpose.msra.mxu0 0.0
        %937 = vmatprep.subr.mxu0 0.0
        %938 = vmatpush1.xpose.msra.mxu0 0.0
        %939 = vmatprep.subr.mxu0 0.0
        %940 = vmatpush1.xpose.msra.mxu0 0.0
        %941 = vmatprep.subr.mxu0 0.0
        %942 = vmatpush1.xpose.msra.mxu0 0.0
        %943 = vmatprep.subr.mxu0 0.0
        %944 = vmatpush1.xpose.msra.mxu0 0.0
        %945 = vmatprep.subr.mxu0 0.0
        %946 = vmatpush1.xpose.msra.mxu0 0.0
        %947 = vmatprep.subr.mxu0 0.0
        %948 = vmatpush1.xpose.msra.mxu0 0.0
        %949 = vmatprep.subr.mxu0 0.0
        %950 = vmatpush1.xpose.msra.mxu0 0.0
        %951 = vmatprep.subr.mxu0 0.0
        %952 = vmatpush1.xpose.msra.mxu0 0.0
        %953 = vmatprep.subr.mxu0 0.0
        %954 = vmatpush1.xpose.msra.mxu0 0.0
        %955 = vmatprep.subr.mxu0 0.0
        %956 = vmatpush1.xpose.msra.mxu0 0.0
        %957 = vmatprep.subr.mxu0 0.0
        %958 = vmatpush1.xpose.msra.mxu0 0.0
        %959 = vmatprep.subr.mxu0 0.0
        %960 = vmatpush1.xpose.msra.mxu0 0.0
        %961 = vmatprep.subr.mxu0 0.0
        %962 = vmatpush1.xpose.msra.mxu0 0.0
        %963 = vmatprep.subr.mxu0 0.0
        %964 = vmatpush1.xpose.msra.mxu0 0.0
        %965 = vmatprep.subr.mxu0 0.0
        %966 = vmatpush1.xpose.msra.mxu0 0.0
        %967 = vmatprep.subr.mxu0 0.0
        %968 = vmatpush1.xpose.msra.mxu0 0.0
        %969 = vmatprep.subr.mxu0 0.0
        %970 = vmatpush1.xpose.msra.mxu0 0.0
        %971 = vmatprep.subr.mxu0 0.0
        %972 = vmatpush1.xpose.msra.mxu0 0.0
        %973 = vmatprep.subr.mxu0 0.0
        %974 = vmatpush1.xpose.msra.mxu0 0.0
        %975 = vmatprep.subr.mxu0 0.0
        %976 = vmatpush1.xpose.msra.mxu0 0.0
        %977 = vmatprep.subr.mxu0 0.0
        %978 = vmatpush1.xpose.msra.mxu0 0.0
        %979 = vmatprep.subr.mxu0 0.0
        %980 = vmatpush1.xpose.msra.mxu0 0.0
        %981 = vmatprep.subr.mxu0 0.0
        %982 = vmatpush1.xpose.msra.mxu0 0.0
        %983 = vmatprep.subr.mxu0 0.0
        %984 = vmatpush1.xpose.msra.mxu0 0.0
        %985 = vmatprep.subr.mxu0 0.0
        %986 = vmatpush1.xpose.msra.mxu0 0.0
        %987 = vmatprep.subr.mxu0 0.0
        %988 = vmatpush1.xpose.msra.mxu0 0.0
        %989 = vmatprep.mubr.f32.mxu0 0.0
        %990 = vmatmul.mubr.f32.gmra.mrb[0].mxu0 %v919
        %v991 = vpop.f32.mrb[0].mxu0
        %v992 = vadd.f32 0.0, %v991
        %v993 = vpop.f32.mrb[0].mxu0
        %994 = vdwg.mxu0
        %s995 = scalar_lea.vmem [#allocation2], 24
        %v996 = vld [vmem:[%s995] sm:$0xff]
        %v997 = vsel %vm384, %v992, -inf
        %998 = vmax.xlane.f32.xlu0 %v997
        %v999 = vpop.xlane.xlu0 %998
        %v1000 = vmax.f32 %v996, %v999
        %v1001 = vsub.f32 %v996, %v1000
        %v1002 = vmul.f32 %v1001, 1.442695
        %v1003 = vpow.pop %v1002
        %1005 = vset.pattern.permute.xlu0 0
        %1006 = vperm.xlu0 %1005, %v1000
        %v1007 = vpop.permute.xlu0 %1006
        %v1009 = vsub.f32 %v992, %v1007
        %v1010 = vmul.f32 %v1009, 1.442695
        %v1011 = vpow.pop %v1010
        %s1012 = scalar_lea.vmem [#allocation3], 24
        %v1013 = vld [vmem:[%s1012] sm:$0xff]
        %v1014 = vmul.f32 %v1003, %v1013
        %v1015 = vsel %vm384, %v1011, 0.0
        %1016 = vadd.xlane.f32.xlu0 %v1015
        %v1017 = vpop.xlane.xlu0 %1016
        %v1018 = vadd.f32 %v1014, %v1017
        %1019 = vst.msk [vmem:[%s1012] sm:$0xff] %vm406, %v1018
        %1022 = vrot.lane.b32.xlu0 %v910, 104
        %v1023 = vpop.permute.xlu0 %1022
        %1024 = vrot.lane.b32.xlu0 %v911, 104
        %v1025 = vpop.permute.xlu0 %1024
        %v1029 = vsel %vm384, %v1011, 0
        %1031 = vmatprep.subr.mxu0 0.0
        %1032 = vmatpush1.msra.mxu0 %v1023
        %1033 = vmatprep.subr.mxu0 0.0
        %1034 = vmatpush1.msra.mxu0 %v1025
        %1035 = vmatprep.subr.mxu0 0.0
        %1036 = vmatpush1.msra.mxu0 0.0
        %1037 = vmatprep.subr.mxu0 0.0
        %1038 = vmatpush1.msra.mxu0 0.0
        %1039 = vmatprep.subr.mxu0 0.0
        %1040 = vmatpush1.msra.mxu0 0.0
        %1041 = vmatprep.subr.mxu0 0.0
        %1042 = vmatpush1.msra.mxu0 0.0
        %1043 = vmatprep.subr.mxu0 0.0
        %1044 = vmatpush1.msra.mxu0 0.0
        %1045 = vmatprep.subr.mxu0 0.0
        %1046 = vmatpush1.msra.mxu0 0.0
        %1047 = vmatprep.subr.mxu0 0.0
        %1048 = vmatpush1.msra.mxu0 0.0
        %1049 = vmatprep.subr.mxu0 0.0
        %1050 = vmatpush1.msra.mxu0 0.0
        %1051 = vmatprep.subr.mxu0 0.0
        %1052 = vmatpush1.msra.mxu0 0.0
        %1053 = vmatprep.subr.mxu0 0.0
        %1054 = vmatpush1.msra.mxu0 0.0
        %1055 = vmatprep.subr.mxu0 0.0
        %1056 = vmatpush1.msra.mxu0 0.0
        %1057 = vmatprep.subr.mxu0 0.0
        %1058 = vmatpush1.msra.mxu0 0.0
        %1059 = vmatprep.subr.mxu0 0.0
        %1060 = vmatpush1.msra.mxu0 0.0
        %1061 = vmatprep.subr.mxu0 0.0
        %1062 = vmatpush1.msra.mxu0 0.0
        %1063 = vmatprep.subr.mxu0 0.0
        %1064 = vmatpush1.msra.mxu0 0.0
        %1065 = vmatprep.subr.mxu0 0.0
        %1066 = vmatpush1.msra.mxu0 0.0
        %1067 = vmatprep.subr.mxu0 0.0
        %1068 = vmatpush1.msra.mxu0 0.0
        %1069 = vmatprep.subr.mxu0 0.0
        %1070 = vmatpush1.msra.mxu0 0.0
        %1071 = vmatprep.subr.mxu0 0.0
        %1072 = vmatpush1.msra.mxu0 0.0
        %1073 = vmatprep.subr.mxu0 0.0
        %1074 = vmatpush1.msra.mxu0 0.0
        %1075 = vmatprep.subr.mxu0 0.0
        %1076 = vmatpush1.msra.mxu0 0.0
        %1077 = vmatprep.subr.mxu0 0.0
        %1078 = vmatpush1.msra.mxu0 0.0
        %1079 = vmatprep.subr.mxu0 0.0
        %1080 = vmatpush1.msra.mxu0 0.0
        %1081 = vmatprep.subr.mxu0 0.0
        %1082 = vmatpush1.msra.mxu0 0.0
        %1083 = vmatprep.subr.mxu0 0.0
        %1084 = vmatpush1.msra.mxu0 0.0
        %1085 = vmatprep.subr.mxu0 0.0
        %1086 = vmatpush1.msra.mxu0 0.0
        %1087 = vmatprep.subr.mxu0 0.0
        %1088 = vmatpush1.msra.mxu0 0.0
        %1089 = vmatprep.subr.mxu0 0.0
        %1090 = vmatpush1.msra.mxu0 0.0
        %1091 = vmatprep.subr.mxu0 0.0
        %1092 = vmatpush1.msra.mxu0 0.0
        %1093 = vmatprep.subr.mxu0 0.0
        %1094 = vmatpush1.msra.mxu0 0.0
        %1095 = vmatprep.mubr.f32.mxu0 0.0
        %1096 = vmatmul.mubr.f32.gmra.mrb[0].mxu0 %v1029
        %v1097 = vpop.f32.mrb[0].mxu0
        %v1098 = vadd.f32 0.0, %v1097
        %v1099 = vpop.f32.mrb[0].mxu0
        %1100 = vdwg.mxu0
        %s1101 = scalar_lea.vmem [#allocation4], 24
        %v1102 = vld [vmem:[%s1101] sm:$0xff]
        %1104 = vset.pattern.permute.xlu0 0
        %1105 = vperm.xlu0 %1104, %v1003
        %v1106 = vpop.permute.xlu0 %1105
        %v1108 = vmul.f32 %v1106, %v1102
        %v1109 = vadd.f32 %v1108, %v1098
        %1110 = vst.msk [vmem:[%s1101] sm:$0xff] %vm303, %v1109
        %1111 = vst.msk [vmem:[%s995] sm:$0xff] %vm406, %v1000
        // Predicated region
        $region49: #{tpu_custom_call.1} parent=31 // pred_check
          %p1112 = pneg %p279
        $region50: #{tpu_custom_call.1} parent=31 // pred_check_branch
          %1114 = sbr.rel (%p1112) target = $region52
        $region51: #{tpu_custom_call.1} parent=31 // pred_region
          %v1115 = vld [vmem:[#allocation4] sm:$0xff]
          %v1116 = vld [vmem:[#allocation3] sm:$0xff]
          %v1117 = vrcp.pop %v1116
          %1119 = vset.pattern.permute.xlu0 0
          %1120 = vperm.xlu0 %1119, %v1117
          %v1121 = vpop.permute.xlu0 %1120
          %v1123 = vmul.f32 %v1115, %v1121
          %1124 = vst.msk [vmem:[%s276] sm:$0xff] %vm303, %v1123
          %v1125 = vld [vmem:[%s687] sm:$0xff]
          %v1126 = vld [vmem:[%s598] sm:$0xff]
          %v1127 = vrcp.pop %v1126
          %1129 = vset.pattern.permute.xlu0 0
          %1130 = vperm.xlu0 %1129, %v1127
          %v1131 = vpop.permute.xlu0 %1130
          %v1133 = vmul.f32 %v1125, %v1131
          %1135 = vrot.lane.b32.xlu0 %v1133, 8
          %v1136 = vpop.permute.xlu0 %1135
          %vm1138 = vcmask 130112
          %1139 = vst.msk [vmem:[%s276] sm:$0xff] %vm1138, %v1136
          %v1140 = vld [vmem:[%s894] sm:$0xff]
          %v1141 = vld [vmem:[%s805] sm:$0xff]
          %v1142 = vrcp.pop %v1141
          %1144 = vset.pattern.permute.xlu0 0
          %1145 = vperm.xlu0 %1144, %v1142
          %v1146 = vpop.permute.xlu0 %1145
          %v1148 = vmul.f32 %v1140, %v1146
          %1150 = vrot.lane.b32.xlu0 %v1148, 16
          %v1151 = vpop.permute.xlu0 %1150
          %vm1153 = vcmask 195712
          %1154 = vst.msk [vmem:[%s276] sm:$0xff] %vm1153, %v1151
          %v1155 = vld [vmem:[%s1101] sm:$0xff]
          %v1156 = vld [vmem:[%s1012] sm:$0xff]
          %v1157 = vrcp.pop %v1156
          %1159 = vset.pattern.permute.xlu0 0
          %1160 = vperm.xlu0 %1159, %v1157
          %v1161 = vpop.permute.xlu0 %1160
          %v1163 = vmul.f32 %v1155, %v1161
          %1165 = vrot.lane.b32.xlu0 %v1163, 24
          %v1166 = vpop.permute.xlu0 %1165
          %vm1168 = vcmask 261312
          %1169 = vst.msk [vmem:[%s276] sm:$0xff] %vm1168, %v1166
        $region52: #{tpu_custom_call.1} parent=31 // pred_fallthru
          _
        %s1170 = sand.u32 %s132, 1
        %s1171 = scalar_lea.sflag [#allocation7], %s1170
        %s1172 = sand.u32 %s132, 1
        %s1173 = smul.addr %s1172, 8
        %s1174 = scalar_lea.vmem [#allocation11], %s1173
        // Predicated region
        $region53: #{tpu_custom_call.1} parent=31 // pred_check
          %p1175 = pneg %p142
        $region54: #{tpu_custom_call.1} parent=31 // pred_check_branch
          %1177 = sbr.rel (%p1175) target = $region56
        $region55: #{tpu_custom_call.1} parent=31 // pred_region
          %s1179 = ssub.s32 128, 128
          %1180 = vsyncadd %s1171, %s1179
          %s1181 = sadd.s32 %s26, %s27
          %s1182 = smul.addr %s1181, 128
          %s1183 = scalar_lea.hbm %s3, %s1182
          %s1185 = sshll.u32 %s1174, 4
          %s1186 = int_to_ptr.vmem [resolvable:$true] %s1185
          %1188 = dma.vmem_to_hbm [thread:$0]  %s1186, 128, %s1183, %s1171
        $region56: #{tpu_custom_call.1} parent=31 // pred_fallthru
          _
      $region32: #{tpu_custom_call.1} parent=5 // pred_fallthru
        _
      %p1189 = scmp.le.s32.totalorder 2, %s16
      // Predicated region
      $region57: #{tpu_custom_call.1} parent=5 // pred_check
        %p1190 = pneg %p1189
      $region58: #{tpu_custom_call.1} parent=5 // pred_check_branch
        %1192 = sbr.rel (%p1190) target = $region60
      $region59: #{tpu_custom_call.1} parent=5 // pred_region
        %s1193 = ssub.s32 %s16, 2
        // Predicated region
        $region61: #{tpu_custom_call.1} parent=59 // pred_check
          %p1194 = pneg %p148
        $region62: #{tpu_custom_call.1} parent=59 // pred_check_branch
          %1196 = sbr.rel (%p1194) target = $region64
        $region63: #{tpu_custom_call.1} parent=59 // pred_region
          %s1197 = sand.u32 %s133, 1
          %s1198 = scalar_lea.sflag [#allocation7], %s1197
          %s1199 = sand.u32 %s133, 1
          %s1200 = smul.addr %s1199, 8
          %s1201 = scalar_lea.vmem [#allocation11], %s1200
          %1202 = dma.done %s1198, 128
        $region64: #{tpu_custom_call.1} parent=59 // pred_fallthru
          _
      $region60: #{tpu_custom_call.1} parent=5 // pred_fallthru
        _
    $region6: #{tpu_custom_call.1} parent=1 // loop_footer
      %s20 = sadd.s32 1, %s16
    $region7: #{tpu_custom_call.1} parent=1 // loop_footer_branch
      %15 = sbr.rel target = $region3
    $region8: #{tpu_custom_call.1} parent=1 // loop_exit
      _
    %1203 = vsyncpa [#allocation6], 1
    %s1204 = scalar_lea.sflag [#allocation6], 1
    %1205 = vsyncpa %s1204, 1
    %1206 = vsyncpa [#allocation9], 1
    %s1207 = scalar_lea.sflag [#allocation9], 1
    %1208 = vsyncpa %s1207, 1
    %1209 = vsyncpa [#allocation7], 1
    %s1210 = scalar_lea.sflag [#allocation7], 1
    %1211 = vsyncpa %s1210, 1

</llo_original>
